<compile_context>
chip_gen: v6e
topology: v6e:2x2x1
jax: 0.10.0
libtpu: 0.0.40
codegen_flags: <defaults>
</compile_context>

<pallas_src>
import functools

import numpy as np
import jax
import jax.numpy as jnp
from jax import lax
from jax.experimental import pallas as pl
from jax.experimental.pallas import tpu as pltpu

# cfg.TRAIN constants from siamban (defined in-script, deterministic).
HARD_NEGATIVE_THS = 0.5
RANK_NUM_HARD_NEGATIVE_SAMPLES = 8

_I32_MAX = np.int32(np.iinfo(np.int32).max)
_I32_MIN = np.int32(np.iinfo(np.int32).min)


def _rank_cls_kernel(pred_ref, label_ref, out_ref, *,
                     L, margin, flagsigmoid, hard_ths, num_hard):
    # Block shape (1, rows, 128): work directly in native tile layout.
    p = pred_ref[...].astype(jnp.float32)
    lab = label_ref[...].astype(jnp.float32)

    # TODO(synk): flagsigmoid path assumes `p` already holds sigmoid
    # probabilities (as the torch code does) and compares them to 0.5 directly.
    v = p if flagsigmoid else jnp.exp(p)

    pos_b = lab == 1.0
    neg_b = lab == 0.0
    pos_f = pos_b.astype(jnp.float32)
    neg_f = neg_b.astype(jnp.float32)

    num_pos = jnp.sum(pos_f)
    num_neg = jnp.sum(neg_f)
    hard_cnt = jnp.sum((neg_b & (v > hard_ths)).astype(jnp.float32))

    # Unified top-k size: k = num_pos (positive branch) or max(hard_cnt, 8)
    # (negative branch); clamped to [1, num_neg] like torch's slice semantics.
    k_raw = jnp.where(num_pos > 0.0, num_pos,
                      jnp.maximum(hard_cnt, jnp.float32(num_hard)))
    k_eff = jnp.maximum(jnp.minimum(k_raw, num_neg), 1.0)

    # Monotone int32 order keys of the float values (exact total order);
    # non-negative keys among negatives only, everything else forced to -inf key.
    u = pltpu.bitcast(v, jnp.int32)
    key = jnp.where(u >= 0, u, u ^ jnp.int32(0x7FFFFFFF))
    key_m = jnp.where(neg_b, key, _I32_MIN)      # hoisted out of the bisection

    key_neg_max = jnp.max(key_m)
    key_neg_min = jnp.min(jnp.where(neg_b, key, _I32_MAX))

    lo0 = key_neg_min - jnp.int32(1)   # count(key > lo0) == num_neg >= k_eff
    hi0 = key_neg_max                  # count(key > hi0) == 0       <  k_eff

    def bisect_body(_, carry):
        lo, hi = carry
        # overflow-safe floor((lo + hi) / 2)
        mid = (lo >> 1) + (hi >> 1) + (lo & hi & jnp.int32(1))
        cnt = jnp.sum((key_m > mid).astype(jnp.float32))
        ge = cnt >= k_eff
        return (jnp.where(ge, mid, lo), jnp.where(ge, hi, mid))

    # 32 halvings of an int32 interval -> exact k-th largest key.
    _, kth_key = lax.fori_loop(0, 32, bisect_body, (lo0, hi0), unroll=True)

    big_neg = jnp.float32(-3.0e38)
    has_neg = num_neg > 0.0
    v_k = jnp.max(jnp.where(neg_b & (key <= kth_key), v, big_neg))
    v_k = jnp.where(has_neg, v_k, 0.0)                 # NaN-safe guard
    m = jnp.max(jnp.where(neg_b, v, big_neg))          # max over negatives
    m = jnp.where(has_neg, m, 0.0)

    # Top-k multiset = {values strictly above v_k} + (k - count) copies of v_k.
    sel_gt = neg_b & (v > v_k)
    w = sel_gt.astype(jnp.float32)
    e = jnp.exp(jnp.where(sel_gt, v, m) - m)           # args <= 0: no overflow
    c1 = jnp.sum(w)
    e_gt = jnp.sum(w * e)
    s_gt = jnp.sum(w * v * e)

    t_cnt = jnp.maximum(k_eff - c1, 0.0)               # tie copies of v_k
    tie_e = jnp.exp(v_k - m)                           # v_k <= m
    denom = e_gt + t_cnt * tie_e
    numer = s_gt + t_cnt * v_k * tie_e
    neg_dist = numer / jnp.maximum(denom, 1e-30)

    pos_dist = jnp.sum(v * pos_f) / jnp.maximum(num_pos, 1.0)
    target = jnp.where(num_pos > 0.0, pos_dist, 1.0)

    loss_val = jnp.log(1.0 + jnp.exp(L * (neg_dist - target + margin))) / L
    valid = hard_cnt > 0.0                             # torch `continue`
    loss = jnp.where(valid, loss_val, 0.0)

    # Pack (loss, valid) into one lane-dense output row: lane0=loss, lane1=valid.
    lane = lax.broadcasted_iota(jnp.int32, out_ref.shape, 2)
    out_ref[...] = jnp.where(lane == 0, loss,
                             jnp.where(lane == 1, valid.astype(jnp.float32), 0.0))


def rank_cls_loss(x, label, L=4, margin=0.5, flagsigmoid=False):
    """Pallas implementation of Rank_CLS_Loss.forward."""
    B = x.shape[0]
    pred = x.reshape(B, -1, 2)                 # same as torch .view(B, -1, 2)
    p1 = pred[:, :, 1].astype(jnp.float32)     # (B, N) class-1 logits
    lab = label.reshape(B, -1).astype(jnp.float32)
    n0 = p1.shape[1]

    # Pad lane dim to a multiple of 128 with ignore label (-1): no effect.
    n_pad = ((n0 + 127) // 128) * 128
    if n_pad != n0:
        p1 = jnp.pad(p1, ((0, 0), (0, n_pad - n0)))
        lab = jnp.pad(lab, ((0, 0), (0, n_pad - n0)), constant_values=-1.0)
    rows = n_pad // 128
    p3 = p1.reshape(B, rows, 128)
    l3 = lab.reshape(B, rows, 128)

    kern = functools.partial(
        _rank_cls_kernel, L=float(L), margin=float(margin),
        flagsigmoid=flagsigmoid, hard_ths=float(HARD_NEGATIVE_THS),
        num_hard=int(RANK_NUM_HARD_NEGATIVE_SAMPLES))

    out = pl.pallas_call(
        kern,
        out_shape=jax.ShapeDtypeStruct((B, 1, 128), jnp.float32),
        grid_spec=pltpu.PrefetchScalarGridSpec(
            num_scalar_prefetch=0,
            grid=(B,),
            in_specs=[pl.BlockSpec((1, rows, 128), lambda b: (b, 0, 0)),
                      pl.BlockSpec((1, rows, 128), lambda b: (b, 0, 0))],
            out_specs=pl.BlockSpec((1, 1, 128), lambda b: (b, 0, 0))),
        compiler_params=pltpu.CompilerParams(
            dimension_semantics=("parallel",)),
    )(p3, l3)

    per_batch = out[:, 0, 0]
    valid = out[:, 0, 1]
    n_valid = jnp.sum(valid)
    # torch: mean over non-skipped batches; 0.0 if all skipped
    return jnp.where(n_valid > 0,
                     jnp.sum(per_batch) / jnp.maximum(n_valid, 1.0),
                     jnp.float32(0.0))


def reference_loss(x, label, L=4.0, margin=0.5):
    """Pure NumPy re-implementation of the torch forward (non-sigmoid path)."""
    x = np.asarray(x, dtype=np.float64)
    label = np.asarray(label)
    B = x.shape[0]
    pred = x.reshape(B, -1, 2)
    lab = label.reshape(B, -1)
    losses = []
    for b in range(B):
        pos = np.where(lab[b] == 1)[0]
        neg = np.where(lab[b] == 0)[0]
        if len(pos) > 0:
            pos_prob = np.exp(pred[b, pos, 1])
            neg_prob = np.exp(pred[b, neg, 1])
            if (neg_prob > HARD_NEGATIVE_THS).sum() == 0:
                continue
            num_pos = len(pos)
            neg_value = np.sort(neg_prob)[::-1][:num_pos]
            pos_value = np.sort(pos_prob)[::-1][:num_pos]
            q = np.exp(neg_value - neg_value.max()); q = q / q.sum()
            neg_dist = (neg_value * q).sum()
            pos_dist = pos_value.sum() / len(pos_value)
            loss = np.log(1.0 + np.exp(L * (neg_dist - pos_dist + margin))) / L
        else:
            neg_prob = np.exp(pred[b, neg, 1])
            hard = int((neg_prob > HARD_NEGATIVE_THS).sum())
            if hard == 0:
                continue
            num_neg = max(hard, RANK_NUM_HARD_NEGATIVE_SAMPLES)
            neg_value = np.sort(neg_prob)[::-1][:num_neg]
            q = np.exp(neg_value - neg_value.max()); q = q / q.sum()
            neg_dist = (neg_value * q).sum()
            loss = np.log(1.0 + np.exp(L * (neg_dist - 1.0 + margin))) / L
        losses.append(loss)
    return float(np.mean(losses)) if losses else 0.0


if __name__ == "__main__":
    key = jax.random.PRNGKey(0)
    k1, k2 = jax.random.split(key)

    B, C, H, W = 2, 4, 16, 16                 # -> N = C*H*W/2 = 512 anchors
    N = (C * H * W) // 2
    x = jax.random.normal(k1, (B, C, H, W), dtype=jnp.float32)
    # labels in {-1, 0, 1}
    label = jax.random.randint(k2, (B, N), 0, 3).astype(jnp.int32) - 1
    # make batch 1 have no positives so both branches are exercised
    label = label.at[1].set(jnp.where(label[1] == 1, -1, label[1]))

    out = rank_cls_loss(x, label, L=4, margin=0.5, flagsigmoid=False)
    out = jax.block_until_ready(out)

    ref = reference_loss(np.asarray(x), np.asarray(label), L=4.0, margin=0.5)
    assert np.allclose(float(out), ref, rtol=2e-3, atol=2e-3), (float(out), ref)

    print("KERNEL_OK")
</pallas_src>

<mosaic_0001>
module attributes {stable_mosaic.version = 11 : i64} {
  func.func @_rank_cls_kernel(%arg0: i32, %arg1: memref<1x4x128xf32, #tpu.memory_space<vmem>>, %arg2: memref<1x4x128xf32, #tpu.memory_space<vmem>>, %arg3: memref<1x1x128xf32, #tpu.memory_space<vmem>>) attributes {dimension_semantics = [#tpu.dimension_semantics<parallel>], iteration_bounds = array<i64: 2>, scalar_prefetch = 0 : i64, scratch_operands = 0 : i64, tpu.core_type = #tpu.core_type<tc>, window_params = [{transform_indices = @transform_0, window_bounds = array<i64: 1, 4, 128>}, {transform_indices = @transform_1, window_bounds = array<i64: 1, 4, 128>}, {transform_indices = @transform_2, window_bounds = array<i64: 1, 1, 128>}]} {
    %c0 = arith.constant 0 : index
    %c0_0 = arith.constant 0 : index
    %c0_1 = arith.constant 0 : index
    %0 = vector.load %arg1[%c0, %c0_0, %c0_1] : memref<1x4x128xf32, #tpu.memory_space<vmem>>, vector<1x4x128xf32>
    %c0_2 = arith.constant 0 : index
    %c0_3 = arith.constant 0 : index
    %c0_4 = arith.constant 0 : index
    %1 = vector.load %arg2[%c0_2, %c0_3, %c0_4] : memref<1x4x128xf32, #tpu.memory_space<vmem>>, vector<1x4x128xf32>
    %2 = math.exp %0 : vector<1x4x128xf32>
    %cst = arith.constant 1.000000e+00 : f32
    %3 = vector.broadcast %cst : f32 to vector<1x4x128xf32>
    %4 = arith.cmpf oeq, %1, %3 : vector<1x4x128xf32>
    %cst_5 = arith.constant 0.000000e+00 : f32
    %5 = vector.broadcast %cst_5 : f32 to vector<1x4x128xf32>
    %6 = arith.cmpf oeq, %1, %5 : vector<1x4x128xf32>
    %7 = arith.extui %4 : vector<1x4x128xi1> to vector<1x4x128xi32>
    %8 = arith.sitofp %7 : vector<1x4x128xi32> to vector<1x4x128xf32>
    %9 = arith.extui %6 : vector<1x4x128xi1> to vector<1x4x128xi32>
    %10 = arith.sitofp %9 : vector<1x4x128xi32> to vector<1x4x128xf32>
    %11 = vector.shape_cast %8 : vector<1x4x128xf32> to vector<1x1x4x128xf32>
    %cst_6 = arith.constant dense<0.000000e+00> : vector<1xf32>
    %12 = vector.multi_reduction <add>, %11, %cst_6 [1, 2, 3] : vector<1x1x4x128xf32> to vector<1xf32>
    %13 = vector.shape_cast %12 : vector<1xf32> to vector<1x1x1x1xf32>
    %14 = vector.extract %13[0, 0, 0, 0] : f32 from vector<1x1x1x1xf32>
    %15 = vector.shape_cast %10 : vector<1x4x128xf32> to vector<1x1x4x128xf32>
    %cst_7 = arith.constant dense<0.000000e+00> : vector<1xf32>
    %16 = vector.multi_reduction <add>, %15, %cst_7 [1, 2, 3] : vector<1x1x4x128xf32> to vector<1xf32>
    %17 = vector.shape_cast %16 : vector<1xf32> to vector<1x1x1x1xf32>
    %18 = vector.extract %17[0, 0, 0, 0] : f32 from vector<1x1x1x1xf32>
    %cst_8 = arith.constant 5.000000e-01 : f32
    %19 = vector.broadcast %cst_8 : f32 to vector<1x4x128xf32>
    %20 = arith.cmpf ogt, %2, %19 : vector<1x4x128xf32>
    %21 = arith.andi %6, %20 : vector<1x4x128xi1>
    %22 = arith.extui %21 : vector<1x4x128xi1> to vector<1x4x128xi32>
    %23 = arith.sitofp %22 : vector<1x4x128xi32> to vector<1x4x128xf32>
    %24 = vector.shape_cast %23 : vector<1x4x128xf32> to vector<1x1x4x128xf32>
    %cst_9 = arith.constant dense<0.000000e+00> : vector<1xf32>
    %25 = vector.multi_reduction <add>, %24, %cst_9 [1, 2, 3] : vector<1x1x4x128xf32> to vector<1xf32>
    %26 = vector.shape_cast %25 : vector<1xf32> to vector<1x1x1x1xf32>
    %27 = vector.extract %26[0, 0, 0, 0] : f32 from vector<1x1x1x1xf32>
    %cst_10 = arith.constant 0.000000e+00 : f32
    %28 = arith.cmpf ogt, %14, %cst_10 : f32
    %cst_11 = arith.constant 8.000000e+00 : f32
    %29 = arith.maximumf %27, %cst_11 : f32
    %30 = arith.select %28, %14, %29 : f32
    %31 = arith.minimumf %30, %18 : f32
    %cst_12 = arith.constant 1.000000e+00 : f32
    %32 = arith.maximumf %31, %cst_12 : f32
    %33 = tpu.bitcast %2 : vector<1x4x128xf32> -> vector<1x4x128xi32>
    %c0_i32 = arith.constant 0 : i32
    %34 = vector.broadcast %c0_i32 : i32 to vector<1x4x128xi32>
    %35 = arith.cmpi sge, %33, %34 : vector<1x4x128xi32>
    %c2147483647_i32 = arith.constant 2147483647 : i32
    %36 = vector.broadcast %c2147483647_i32 : i32 to vector<1x4x128xi32>
    %37 = arith.xori %33, %36 : vector<1x4x128xi32>
    %38 = arith.select %35, %33, %37 : vector<1x4x128xi1>, vector<1x4x128xi32>
    %c-2147483648_i32 = arith.constant -2147483648 : i32
    %39 = vector.broadcast %c-2147483648_i32 : i32 to vector<1x4x128xi32>
    %40 = arith.select %6, %38, %39 : vector<1x4x128xi1>, vector<1x4x128xi32>
    %41 = vector.shape_cast %40 : vector<1x4x128xi32> to vector<1x1x4x128xi32>
    %cst_13 = arith.constant dense<-2147483648> : vector<1xi32>
    %42 = vector.multi_reduction <maxsi>, %41, %cst_13 [1, 2, 3] : vector<1x1x4x128xi32> to vector<1xi32>
    %43 = vector.shape_cast %42 : vector<1xi32> to vector<1x1x1x1xi32>
    %44 = vector.extract %43[0, 0, 0, 0] : i32 from vector<1x1x1x1xi32>
    %c2147483647_i32_14 = arith.constant 2147483647 : i32
    %45 = vector.broadcast %c2147483647_i32_14 : i32 to vector<1x4x128xi32>
    %46 = arith.select %6, %38, %45 : vector<1x4x128xi1>, vector<1x4x128xi32>
    %47 = vector.shape_cast %46 : vector<1x4x128xi32> to vector<1x1x4x128xi32>
    %cst_15 = arith.constant dense<2147483647> : vector<1xi32>
    %48 = vector.multi_reduction <minsi>, %47, %cst_15 [1, 2, 3] : vector<1x1x4x128xi32> to vector<1xi32>
    %49 = vector.shape_cast %48 : vector<1xi32> to vector<1x1x1x1xi32>
    %50 = vector.extract %49[0, 0, 0, 0] : i32 from vector<1x1x1x1xi32>
    %c1_i32 = arith.constant 1 : i32
    %51 = arith.subi %50, %c1_i32 : i32
    %c0_i32_16 = arith.constant 0 : i32
    %c1_i32_17 = arith.constant 1 : i32
    %52 = arith.shrsi %51, %c1_i32_17 : i32
    %c1_i32_18 = arith.constant 1 : i32
    %53 = arith.shrsi %44, %c1_i32_18 : i32
    %54 = arith.addi %52, %53 : i32
    %55 = arith.andi %51, %44 : i32
    %c1_i32_19 = arith.constant 1 : i32
    %56 = arith.andi %55, %c1_i32_19 : i32
    %57 = arith.addi %54, %56 : i32
    %58 = vector.broadcast %57 : i32 to vector<1x4x128xi32>
    %59 = arith.cmpi sgt, %40, %58 : vector<1x4x128xi32>
    %60 = arith.extui %59 : vector<1x4x128xi1> to vector<1x4x128xi32>
    %61 = arith.sitofp %60 : vector<1x4x128xi32> to vector<1x4x128xf32>
    %62 = vector.shape_cast %61 : vector<1x4x128xf32> to vector<1x1x4x128xf32>
    %cst_20 = arith.constant dense<0.000000e+00> : vector<1xf32>
    %63 = vector.multi_reduction <add>, %62, %cst_20 [1, 2, 3] : vector<1x1x4x128xf32> to vector<1xf32>
    %64 = vector.shape_cast %63 : vector<1xf32> to vector<1x1x1x1xf32>
    %65 = vector.extract %64[0, 0, 0, 0] : f32 from vector<1x1x1x1xf32>
    %66 = arith.cmpf oge, %65, %32 : f32
    %67 = arith.select %66, %57, %51 : i32
    %68 = arith.select %66, %44, %57 : i32
    %c1_i32_21 = arith.constant 1 : i32
    %c1_i32_22 = arith.constant 1 : i32
    %69 = arith.shrsi %67, %c1_i32_22 : i32
    %c1_i32_23 = arith.constant 1 : i32
    %70 = arith.shrsi %68, %c1_i32_23 : i32
    %71 = arith.addi %69, %70 : i32
    %72 = arith.andi %67, %68 : i32
    %c1_i32_24 = arith.constant 1 : i32
    %73 = arith.andi %72, %c1_i32_24 : i32
    %74 = arith.addi %71, %73 : i32
    %75 = vector.broadcast %74 : i32 to vector<1x4x128xi32>
    %76 = arith.cmpi sgt, %40, %75 : vector<1x4x128xi32>
    %77 = arith.extui %76 : vector<1x4x128xi1> to vector<1x4x128xi32>
    %78 = arith.sitofp %77 : vector<1x4x128xi32> to vector<1x4x128xf32>
    %79 = vector.shape_cast %78 : vector<1x4x128xf32> to vector<1x1x4x128xf32>
    %cst_25 = arith.constant dense<0.000000e+00> : vector<1xf32>
    %80 = vector.multi_reduction <add>, %79, %cst_25 [1, 2, 3] : vector<1x1x4x128xf32> to vector<1xf32>
    %81 = vector.shape_cast %80 : vector<1xf32> to vector<1x1x1x1xf32>
    %82 = vector.extract %81[0, 0, 0, 0] : f32 from vector<1x1x1x1xf32>
    %83 = arith.cmpf oge, %82, %32 : f32
    %84 = arith.select %83, %74, %67 : i32
    %85 = arith.select %83, %68, %74 : i32
    %c2_i32 = arith.constant 2 : i32
    %c1_i32_26 = arith.constant 1 : i32
    %86 = arith.shrsi %84, %c1_i32_26 : i32
    %c1_i32_27 = arith.constant 1 : i32
    %87 = arith.shrsi %85, %c1_i32_27 : i32
    %88 = arith.addi %86, %87 : i32
    %89 = arith.andi %84, %85 : i32
    %c1_i32_28 = arith.constant 1 : i32
    %90 = arith.andi %89, %c1_i32_28 : i32
    %91 = arith.addi %88, %90 : i32
    %92 = vector.broadcast %91 : i32 to vector<1x4x128xi32>
    %93 = arith.cmpi sgt, %40, %92 : vector<1x4x128xi32>
    %94 = arith.extui %93 : vector<1x4x128xi1> to vector<1x4x128xi32>
    %95 = arith.sitofp %94 : vector<1x4x128xi32> to vector<1x4x128xf32>
    %96 = vector.shape_cast %95 : vector<1x4x128xf32> to vector<1x1x4x128xf32>
    %cst_29 = arith.constant dense<0.000000e+00> : vector<1xf32>
    %97 = vector.multi_reduction <add>, %96, %cst_29 [1, 2, 3] : vector<1x1x4x128xf32> to vector<1xf32>
    %98 = vector.shape_cast %97 : vector<1xf32> to vector<1x1x1x1xf32>
    %99 = vector.extract %98[0, 0, 0, 0] : f32 from vector<1x1x1x1xf32>
    %100 = arith.cmpf oge, %99, %32 : f32
    %101 = arith.select %100, %91, %84 : i32
    %102 = arith.select %100, %85, %91 : i32
    %c3_i32 = arith.constant 3 : i32
    %c1_i32_30 = arith.constant 1 : i32
    %103 = arith.shrsi %101, %c1_i32_30 : i32
    %c1_i32_31 = arith.constant 1 : i32
    %104 = arith.shrsi %102, %c1_i32_31 : i32
    %105 = arith.addi %103, %104 : i32
    %106 = arith.andi %101, %102 : i32
    %c1_i32_32 = arith.constant 1 : i32
    %107 = arith.andi %106, %c1_i32_32 : i32
    %108 = arith.addi %105, %107 : i32
    %109 = vector.broadcast %108 : i32 to vector<1x4x128xi32>
    %110 = arith.cmpi sgt, %40, %109 : vector<1x4x128xi32>
    %111 = arith.extui %110 : vector<1x4x128xi1> to vector<1x4x128xi32>
    %112 = arith.sitofp %111 : vector<1x4x128xi32> to vector<1x4x128xf32>
    %113 = vector.shape_cast %112 : vector<1x4x128xf32> to vector<1x1x4x128xf32>
    %cst_33 = arith.constant dense<0.000000e+00> : vector<1xf32>
    %114 = vector.multi_reduction <add>, %113, %cst_33 [1, 2, 3] : vector<1x1x4x128xf32> to vector<1xf32>
    %115 = vector.shape_cast %114 : vector<1xf32> to vector<1x1x1x1xf32>
    %116 = vector.extract %115[0, 0, 0, 0] : f32 from vector<1x1x1x1xf32>
    %117 = arith.cmpf oge, %116, %32 : f32
    %118 = arith.select %117, %108, %101 : i32
    %119 = arith.select %117, %102, %108 : i32
    %c4_i32 = arith.constant 4 : i32
    %c1_i32_34 = arith.constant 1 : i32
    %120 = arith.shrsi %118, %c1_i32_34 : i32
    %c1_i32_35 = arith.constant 1 : i32
    %121 = arith.shrsi %119, %c1_i32_35 : i32
    %122 = arith.addi %120, %121 : i32
    %123 = arith.andi %118, %119 : i32
    %c1_i32_36 = arith.constant 1 : i32
    %124 = arith.andi %123, %c1_i32_36 : i32
    %125 = arith.addi %122, %124 : i32
    %126 = vector.broadcast %125 : i32 to vector<1x4x128xi32>
    %127 = arith.cmpi sgt, %40, %126 : vector<1x4x128xi32>
    %128 = arith.extui %127 : vector<1x4x128xi1> to vector<1x4x128xi32>
    %129 = arith.sitofp %128 : vector<1x4x128xi32> to vector<1x4x128xf32>
    %130 = vector.shape_cast %129 : vector<1x4x128xf32> to vector<1x1x4x128xf32>
    %cst_37 = arith.constant dense<0.000000e+00> : vector<1xf32>
    %131 = vector.multi_reduction <add>, %130, %cst_37 [1, 2, 3] : vector<1x1x4x128xf32> to vector<1xf32>
    %132 = vector.shape_cast %131 : vector<1xf32> to vector<1x1x1x1xf32>
    %133 = vector.extract %132[0, 0, 0, 0] : f32 from vector<1x1x1x1xf32>
    %134 = arith.cmpf oge, %133, %32 : f32
    %135 = arith.select %134, %125, %118 : i32
    %136 = arith.select %134, %119, %125 : i32
    %c5_i32 = arith.constant 5 : i32
    %c1_i32_38 = arith.constant 1 : i32
    %137 = arith.shrsi %135, %c1_i32_38 : i32
    %c1_i32_39 = arith.constant 1 : i32
    %138 = arith.shrsi %136, %c1_i32_39 : i32
    %139 = arith.addi %137, %138 : i32
    %140 = arith.andi %135, %136 : i32
    %c1_i32_40 = arith.constant 1 : i32
    %141 = arith.andi %140, %c1_i32_40 : i32
    %142 = arith.addi %139, %141 : i32
    %143 = vector.broadcast %142 : i32 to vector<1x4x128xi32>
    %144 = arith.cmpi sgt, %40, %143 : vector<1x4x128xi32>
    %145 = arith.extui %144 : vector<1x4x128xi1> to vector<1x4x128xi32>
    %146 = arith.sitofp %145 : vector<1x4x128xi32> to vector<1x4x128xf32>
    %147 = vector.shape_cast %146 : vector<1x4x128xf32> to vector<1x1x4x128xf32>
    %cst_41 = arith.constant dense<0.000000e+00> : vector<1xf32>
    %148 = vector.multi_reduction <add>, %147, %cst_41 [1, 2, 3] : vector<1x1x4x128xf32> to vector<1xf32>
    %149 = vector.shape_cast %148 : vector<1xf32> to vector<1x1x1x1xf32>
    %150 = vector.extract %149[0, 0, 0, 0] : f32 from vector<1x1x1x1xf32>
    %151 = arith.cmpf oge, %150, %32 : f32
    %152 = arith.select %151, %142, %135 : i32
    %153 = arith.select %151, %136, %142 : i32
    %c6_i32 = arith.constant 6 : i32
    %c1_i32_42 = arith.constant 1 : i32
    %154 = arith.shrsi %152, %c1_i32_42 : i32
    %c1_i32_43 = arith.constant 1 : i32
    %155 = arith.shrsi %153, %c1_i32_43 : i32
    %156 = arith.addi %154, %155 : i32
    %157 = arith.andi %152, %153 : i32
    %c1_i32_44 = arith.constant 1 : i32
    %158 = arith.andi %157, %c1_i32_44 : i32
    %159 = arith.addi %156, %158 : i32
    %160 = vector.broadcast %159 : i32 to vector<1x4x128xi32>
    %161 = arith.cmpi sgt, %40, %160 : vector<1x4x128xi32>
    %162 = arith.extui %161 : vector<1x4x128xi1> to vector<1x4x128xi32>
    %163 = arith.sitofp %162 : vector<1x4x128xi32> to vector<1x4x128xf32>
    %164 = vector.shape_cast %163 : vector<1x4x128xf32> to vector<1x1x4x128xf32>
    %cst_45 = arith.constant dense<0.000000e+00> : vector<1xf32>
    %165 = vector.multi_reduction <add>, %164, %cst_45 [1, 2, 3] : vector<1x1x4x128xf32> to vector<1xf32>
    %166 = vector.shape_cast %165 : vector<1xf32> to vector<1x1x1x1xf32>
    %167 = vector.extract %166[0, 0, 0, 0] : f32 from vector<1x1x1x1xf32>
    %168 = arith.cmpf oge, %167, %32 : f32
    %169 = arith.select %168, %159, %152 : i32
    %170 = arith.select %168, %153, %159 : i32
    %c7_i32 = arith.constant 7 : i32
    %c1_i32_46 = arith.constant 1 : i32
    %171 = arith.shrsi %169, %c1_i32_46 : i32
    %c1_i32_47 = arith.constant 1 : i32
    %172 = arith.shrsi %170, %c1_i32_47 : i32
    %173 = arith.addi %171, %172 : i32
    %174 = arith.andi %169, %170 : i32
    %c1_i32_48 = arith.constant 1 : i32
    %175 = arith.andi %174, %c1_i32_48 : i32
    %176 = arith.addi %173, %175 : i32
    %177 = vector.broadcast %176 : i32 to vector<1x4x128xi32>
    %178 = arith.cmpi sgt, %40, %177 : vector<1x4x128xi32>
    %179 = arith.extui %178 : vector<1x4x128xi1> to vector<1x4x128xi32>
    %180 = arith.sitofp %179 : vector<1x4x128xi32> to vector<1x4x128xf32>
    %181 = vector.shape_cast %180 : vector<1x4x128xf32> to vector<1x1x4x128xf32>
    %cst_49 = arith.constant dense<0.000000e+00> : vector<1xf32>
    %182 = vector.multi_reduction <add>, %181, %cst_49 [1, 2, 3] : vector<1x1x4x128xf32> to vector<1xf32>
    %183 = vector.shape_cast %182 : vector<1xf32> to vector<1x1x1x1xf32>
    %184 = vector.extract %183[0, 0, 0, 0] : f32 from vector<1x1x1x1xf32>
    %185 = arith.cmpf oge, %184, %32 : f32
    %186 = arith.select %185, %176, %169 : i32
    %187 = arith.select %185, %170, %176 : i32
    %c8_i32 = arith.constant 8 : i32
    %c1_i32_50 = arith.constant 1 : i32
    %188 = arith.shrsi %186, %c1_i32_50 : i32
    %c1_i32_51 = arith.constant 1 : i32
    %189 = arith.shrsi %187, %c1_i32_51 : i32
    %190 = arith.addi %188, %189 : i32
    %191 = arith.andi %186, %187 : i32
    %c1_i32_52 = arith.constant 1 : i32
    %192 = arith.andi %191, %c1_i32_52 : i32
    %193 = arith.addi %190, %192 : i32
    %194 = vector.broadcast %193 : i32 to vector<1x4x128xi32>
    %195 = arith.cmpi sgt, %40, %194 : vector<1x4x128xi32>
    %196 = arith.extui %195 : vector<1x4x128xi1> to vector<1x4x128xi32>
    %197 = arith.sitofp %196 : vector<1x4x128xi32> to vector<1x4x128xf32>
    %198 = vector.shape_cast %197 : vector<1x4x128xf32> to vector<1x1x4x128xf32>
    %cst_53 = arith.constant dense<0.000000e+00> : vector<1xf32>
    %199 = vector.multi_reduction <add>, %198, %cst_53 [1, 2, 3] : vector<1x1x4x128xf32> to vector<1xf32>
    %200 = vector.shape_cast %199 : vector<1xf32> to vector<1x1x1x1xf32>
    %201 = vector.extract %200[0, 0, 0, 0] : f32 from vector<1x1x1x1xf32>
    %202 = arith.cmpf oge, %201, %32 : f32
    %203 = arith.select %202, %193, %186 : i32
    %204 = arith.select %202, %187, %193 : i32
    %c9_i32 = arith.constant 9 : i32
    %c1_i32_54 = arith.constant 1 : i32
    %205 = arith.shrsi %203, %c1_i32_54 : i32
    %c1_i32_55 = arith.constant 1 : i32
    %206 = arith.shrsi %204, %c1_i32_55 : i32
    %207 = arith.addi %205, %206 : i32
    %208 = arith.andi %203, %204 : i32
    %c1_i32_56 = arith.constant 1 : i32
    %209 = arith.andi %208, %c1_i32_56 : i32
    %210 = arith.addi %207, %209 : i32
    %211 = vector.broadcast %210 : i32 to vector<1x4x128xi32>
    %212 = arith.cmpi sgt, %40, %211 : vector<1x4x128xi32>
    %213 = arith.extui %212 : vector<1x4x128xi1> to vector<1x4x128xi32>
    %214 = arith.sitofp %213 : vector<1x4x128xi32> to vector<1x4x128xf32>
    %215 = vector.shape_cast %214 : vector<1x4x128xf32> to vector<1x1x4x128xf32>
    %cst_57 = arith.constant dense<0.000000e+00> : vector<1xf32>
    %216 = vector.multi_reduction <add>, %215, %cst_57 [1, 2, 3] : vector<1x1x4x128xf32> to vector<1xf32>
    %217 = vector.shape_cast %216 : vector<1xf32> to vector<1x1x1x1xf32>
    %218 = vector.extract %217[0, 0, 0, 0] : f32 from vector<1x1x1x1xf32>
    %219 = arith.cmpf oge, %218, %32 : f32
    %220 = arith.select %219, %210, %203 : i32
    %221 = arith.select %219, %204, %210 : i32
    %c10_i32 = arith.constant 10 : i32
    %c1_i32_58 = arith.constant 1 : i32
    %222 = arith.shrsi %220, %c1_i32_58 : i32
    %c1_i32_59 = arith.constant 1 : i32
    %223 = arith.shrsi %221, %c1_i32_59 : i32
    %224 = arith.addi %222, %223 : i32
    %225 = arith.andi %220, %221 : i32
    %c1_i32_60 = arith.constant 1 : i32
    %226 = arith.andi %225, %c1_i32_60 : i32
    %227 = arith.addi %224, %226 : i32
    %228 = vector.broadcast %227 : i32 to vector<1x4x128xi32>
    %229 = arith.cmpi sgt, %40, %228 : vector<1x4x128xi32>
    %230 = arith.extui %229 : vector<1x4x128xi1> to vector<1x4x128xi32>
    %231 = arith.sitofp %230 : vector<1x4x128xi32> to vector<1x4x128xf32>
    %232 = vector.shape_cast %231 : vector<1x4x128xf32> to vector<1x1x4x128xf32>
    %cst_61 = arith.constant dense<0.000000e+00> : vector<1xf32>
    %233 = vector.multi_reduction <add>, %232, %cst_61 [1, 2, 3] : vector<1x1x4x128xf32> to vector<1xf32>
    %234 = vector.shape_cast %233 : vector<1xf32> to vector<1x1x1x1xf32>
    %235 = vector.extract %234[0, 0, 0, 0] : f32 from vector<1x1x1x1xf32>
    %236 = arith.cmpf oge, %235, %32 : f32
    %237 = arith.select %236, %227, %220 : i32
    %238 = arith.select %236, %221, %227 : i32
    %c11_i32 = arith.constant 11 : i32
    %c1_i32_62 = arith.constant 1 : i32
    %239 = arith.shrsi %237, %c1_i32_62 : i32
    %c1_i32_63 = arith.constant 1 : i32
    %240 = arith.shrsi %238, %c1_i32_63 : i32
    %241 = arith.addi %239, %240 : i32
    %242 = arith.andi %237, %238 : i32
    %c1_i32_64 = arith.constant 1 : i32
    %243 = arith.andi %242, %c1_i32_64 : i32
    %244 = arith.addi %241, %243 : i32
    %245 = vector.broadcast %244 : i32 to vector<1x4x128xi32>
    %246 = arith.cmpi sgt, %40, %245 : vector<1x4x128xi32>
    %247 = arith.extui %246 : vector<1x4x128xi1> to vector<1x4x128xi32>
    %248 = arith.sitofp %247 : vector<1x4x128xi32> to vector<1x4x128xf32>
    %249 = vector.shape_cast %248 : vector<1x4x128xf32> to vector<1x1x4x128xf32>
    %cst_65 = arith.constant dense<0.000000e+00> : vector<1xf32>
    %250 = vector.multi_reduction <add>, %249, %cst_65 [1, 2, 3] : vector<1x1x4x128xf32> to vector<1xf32>
    %251 = vector.shape_cast %250 : vector<1xf32> to vector<1x1x1x1xf32>
    %252 = vector.extract %251[0, 0, 0, 0] : f32 from vector<1x1x1x1xf32>
    %253 = arith.cmpf oge, %252, %32 : f32
    %254 = arith.select %253, %244, %237 : i32
    %255 = arith.select %253, %238, %244 : i32
    %c12_i32 = arith.constant 12 : i32
    %c1_i32_66 = arith.constant 1 : i32
    %256 = arith.shrsi %254, %c1_i32_66 : i32
    %c1_i32_67 = arith.constant 1 : i32
    %257 = arith.shrsi %255, %c1_i32_67 : i32
    %258 = arith.addi %256, %257 : i32
    %259 = arith.andi %254, %255 : i32
    %c1_i32_68 = arith.constant 1 : i32
    %260 = arith.andi %259, %c1_i32_68 : i32
    %261 = arith.addi %258, %260 : i32
    %262 = vector.broadcast %261 : i32 to vector<1x4x128xi32>
    %263 = arith.cmpi sgt, %40, %262 : vector<1x4x128xi32>
    %264 = arith.extui %263 : vector<1x4x128xi1> to vector<1x4x128xi32>
    %265 = arith.sitofp %264 : vector<1x4x128xi32> to vector<1x4x128xf32>
    %266 = vector.shape_cast %265 : vector<1x4x128xf32> to vector<1x1x4x128xf32>
    %cst_69 = arith.constant dense<0.000000e+00> : vector<1xf32>
    %267 = vector.multi_reduction <add>, %266, %cst_69 [1, 2, 3] : vector<1x1x4x128xf32> to vector<1xf32>
    %268 = vector.shape_cast %267 : vector<1xf32> to vector<1x1x1x1xf32>
    %269 = vector.extract %268[0, 0, 0, 0] : f32 from vector<1x1x1x1xf32>
    %270 = arith.cmpf oge, %269, %32 : f32
    %271 = arith.select %270, %261, %254 : i32
    %272 = arith.select %270, %255, %261 : i32
    %c13_i32 = arith.constant 13 : i32
    %c1_i32_70 = arith.constant 1 : i32
    %273 = arith.shrsi %271, %c1_i32_70 : i32
    %c1_i32_71 = arith.constant 1 : i32
    %274 = arith.shrsi %272, %c1_i32_71 : i32
    %275 = arith.addi %273, %274 : i32
    %276 = arith.andi %271, %272 : i32
    %c1_i32_72 = arith.constant 1 : i32
    %277 = arith.andi %276, %c1_i32_72 : i32
    %278 = arith.addi %275, %277 : i32
    %279 = vector.broadcast %278 : i32 to vector<1x4x128xi32>
    %280 = arith.cmpi sgt, %40, %279 : vector<1x4x128xi32>
    %281 = arith.extui %280 : vector<1x4x128xi1> to vector<1x4x128xi32>
    %282 = arith.sitofp %281 : vector<1x4x128xi32> to vector<1x4x128xf32>
    %283 = vector.shape_cast %282 : vector<1x4x128xf32> to vector<1x1x4x128xf32>
    %cst_73 = arith.constant dense<0.000000e+00> : vector<1xf32>
    %284 = vector.multi_reduction <add>, %283, %cst_73 [1, 2, 3] : vector<1x1x4x128xf32> to vector<1xf32>
    %285 = vector.shape_cast %284 : vector<1xf32> to vector<1x1x1x1xf32>
    %286 = vector.extract %285[0, 0, 0, 0] : f32 from vector<1x1x1x1xf32>
    %287 = arith.cmpf oge, %286, %32 : f32
    %288 = arith.select %287, %278, %271 : i32
    %289 = arith.select %287, %272, %278 : i32
    %c14_i32 = arith.constant 14 : i32
    %c1_i32_74 = arith.constant 1 : i32
    %290 = arith.shrsi %288, %c1_i32_74 : i32
    %c1_i32_75 = arith.constant 1 : i32
    %291 = arith.shrsi %289, %c1_i32_75 : i32
    %292 = arith.addi %290, %291 : i32
    %293 = arith.andi %288, %289 : i32
    %c1_i32_76 = arith.constant 1 : i32
    %294 = arith.andi %293, %c1_i32_76 : i32
    %295 = arith.addi %292, %294 : i32
    %296 = vector.broadcast %295 : i32 to vector<1x4x128xi32>
    %297 = arith.cmpi sgt, %40, %296 : vector<1x4x128xi32>
    %298 = arith.extui %297 : vector<1x4x128xi1> to vector<1x4x128xi32>
    %299 = arith.sitofp %298 : vector<1x4x128xi32> to vector<1x4x128xf32>
    %300 = vector.shape_cast %299 : vector<1x4x128xf32> to vector<1x1x4x128xf32>
    %cst_77 = arith.constant dense<0.000000e+00> : vector<1xf32>
    %301 = vector.multi_reduction <add>, %300, %cst_77 [1, 2, 3] : vector<1x1x4x128xf32> to vector<1xf32>
    %302 = vector.shape_cast %301 : vector<1xf32> to vector<1x1x1x1xf32>
    %303 = vector.extract %302[0, 0, 0, 0] : f32 from vector<1x1x1x1xf32>
    %304 = arith.cmpf oge, %303, %32 : f32
    %305 = arith.select %304, %295, %288 : i32
    %306 = arith.select %304, %289, %295 : i32
    %c15_i32 = arith.constant 15 : i32
    %c1_i32_78 = arith.constant 1 : i32
    %307 = arith.shrsi %305, %c1_i32_78 : i32
    %c1_i32_79 = arith.constant 1 : i32
    %308 = arith.shrsi %306, %c1_i32_79 : i32
    %309 = arith.addi %307, %308 : i32
    %310 = arith.andi %305, %306 : i32
    %c1_i32_80 = arith.constant 1 : i32
    %311 = arith.andi %310, %c1_i32_80 : i32
    %312 = arith.addi %309, %311 : i32
    %313 = vector.broadcast %312 : i32 to vector<1x4x128xi32>
    %314 = arith.cmpi sgt, %40, %313 : vector<1x4x128xi32>
    %315 = arith.extui %314 : vector<1x4x128xi1> to vector<1x4x128xi32>
    %316 = arith.sitofp %315 : vector<1x4x128xi32> to vector<1x4x128xf32>
    %317 = vector.shape_cast %316 : vector<1x4x128xf32> to vector<1x1x4x128xf32>
    %cst_81 = arith.constant dense<0.000000e+00> : vector<1xf32>
    %318 = vector.multi_reduction <add>, %317, %cst_81 [1, 2, 3] : vector<1x1x4x128xf32> to vector<1xf32>
    %319 = vector.shape_cast %318 : vector<1xf32> to vector<1x1x1x1xf32>
    %320 = vector.extract %319[0, 0, 0, 0] : f32 from vector<1x1x1x1xf32>
    %321 = arith.cmpf oge, %320, %32 : f32
    %322 = arith.select %321, %312, %305 : i32
    %323 = arith.select %321, %306, %312 : i32
    %c16_i32 = arith.constant 16 : i32
    %c1_i32_82 = arith.constant 1 : i32
    %324 = arith.shrsi %322, %c1_i32_82 : i32
    %c1_i32_83 = arith.constant 1 : i32
    %325 = arith.shrsi %323, %c1_i32_83 : i32
    %326 = arith.addi %324, %325 : i32
    %327 = arith.andi %322, %323 : i32
    %c1_i32_84 = arith.constant 1 : i32
    %328 = arith.andi %327, %c1_i32_84 : i32
    %329 = arith.addi %326, %328 : i32
    %330 = vector.broadcast %329 : i32 to vector<1x4x128xi32>
    %331 = arith.cmpi sgt, %40, %330 : vector<1x4x128xi32>
    %332 = arith.extui %331 : vector<1x4x128xi1> to vector<1x4x128xi32>
    %333 = arith.sitofp %332 : vector<1x4x128xi32> to vector<1x4x128xf32>
    %334 = vector.shape_cast %333 : vector<1x4x128xf32> to vector<1x1x4x128xf32>
    %cst_85 = arith.constant dense<0.000000e+00> : vector<1xf32>
    %335 = vector.multi_reduction <add>, %334, %cst_85 [1, 2, 3] : vector<1x1x4x128xf32> to vector<1xf32>
    %336 = vector.shape_cast %335 : vector<1xf32> to vector<1x1x1x1xf32>
    %337 = vector.extract %336[0, 0, 0, 0] : f32 from vector<1x1x1x1xf32>
    %338 = arith.cmpf oge, %337, %32 : f32
    %339 = arith.select %338, %329, %322 : i32
    %340 = arith.select %338, %323, %329 : i32
    %c17_i32 = arith.constant 17 : i32
    %c1_i32_86 = arith.constant 1 : i32
    %341 = arith.shrsi %339, %c1_i32_86 : i32
    %c1_i32_87 = arith.constant 1 : i32
    %342 = arith.shrsi %340, %c1_i32_87 : i32
    %343 = arith.addi %341, %342 : i32
    %344 = arith.andi %339, %340 : i32
    %c1_i32_88 = arith.constant 1 : i32
    %345 = arith.andi %344, %c1_i32_88 : i32
    %346 = arith.addi %343, %345 : i32
    %347 = vector.broadcast %346 : i32 to vector<1x4x128xi32>
    %348 = arith.cmpi sgt, %40, %347 : vector<1x4x128xi32>
    %349 = arith.extui %348 : vector<1x4x128xi1> to vector<1x4x128xi32>
    %350 = arith.sitofp %349 : vector<1x4x128xi32> to vector<1x4x128xf32>
    %351 = vector.shape_cast %350 : vector<1x4x128xf32> to vector<1x1x4x128xf32>
    %cst_89 = arith.constant dense<0.000000e+00> : vector<1xf32>
    %352 = vector.multi_reduction <add>, %351, %cst_89 [1, 2, 3] : vector<1x1x4x128xf32> to vector<1xf32>
    %353 = vector.shape_cast %352 : vector<1xf32> to vector<1x1x1x1xf32>
    %354 = vector.extract %353[0, 0, 0, 0] : f32 from vector<1x1x1x1xf32>
    %355 = arith.cmpf oge, %354, %32 : f32
    %356 = arith.select %355, %346, %339 : i32
    %357 = arith.select %355, %340, %346 : i32
    %c18_i32 = arith.constant 18 : i32
    %c1_i32_90 = arith.constant 1 : i32
    %358 = arith.shrsi %356, %c1_i32_90 : i32
    %c1_i32_91 = arith.constant 1 : i32
    %359 = arith.shrsi %357, %c1_i32_91 : i32
    %360 = arith.addi %358, %359 : i32
    %361 = arith.andi %356, %357 : i32
    %c1_i32_92 = arith.constant 1 : i32
    %362 = arith.andi %361, %c1_i32_92 : i32
    %363 = arith.addi %360, %362 : i32
    %364 = vector.broadcast %363 : i32 to vector<1x4x128xi32>
    %365 = arith.cmpi sgt, %40, %364 : vector<1x4x128xi32>
    %366 = arith.extui %365 : vector<1x4x128xi1> to vector<1x4x128xi32>
    %367 = arith.sitofp %366 : vector<1x4x128xi32> to vector<1x4x128xf32>
    %368 = vector.shape_cast %367 : vector<1x4x128xf32> to vector<1x1x4x128xf32>
    %cst_93 = arith.constant dense<0.000000e+00> : vector<1xf32>
    %369 = vector.multi_reduction <add>, %368, %cst_93 [1, 2, 3] : vector<1x1x4x128xf32> to vector<1xf32>
    %370 = vector.shape_cast %369 : vector<1xf32> to vector<1x1x1x1xf32>
    %371 = vector.extract %370[0, 0, 0, 0] : f32 from vector<1x1x1x1xf32>
    %372 = arith.cmpf oge, %371, %32 : f32
    %373 = arith.select %372, %363, %356 : i32
    %374 = arith.select %372, %357, %363 : i32
    %c19_i32 = arith.constant 19 : i32
    %c1_i32_94 = arith.constant 1 : i32
    %375 = arith.shrsi %373, %c1_i32_94 : i32
    %c1_i32_95 = arith.constant 1 : i32
    %376 = arith.shrsi %374, %c1_i32_95 : i32
    %377 = arith.addi %375, %376 : i32
    %378 = arith.andi %373, %374 : i32
    %c1_i32_96 = arith.constant 1 : i32
    %379 = arith.andi %378, %c1_i32_96 : i32
    %380 = arith.addi %377, %379 : i32
    %381 = vector.broadcast %380 : i32 to vector<1x4x128xi32>
    %382 = arith.cmpi sgt, %40, %381 : vector<1x4x128xi32>
    %383 = arith.extui %382 : vector<1x4x128xi1> to vector<1x4x128xi32>
    %384 = arith.sitofp %383 : vector<1x4x128xi32> to vector<1x4x128xf32>
    %385 = vector.shape_cast %384 : vector<1x4x128xf32> to vector<1x1x4x128xf32>
    %cst_97 = arith.constant dense<0.000000e+00> : vector<1xf32>
    %386 = vector.multi_reduction <add>, %385, %cst_97 [1, 2, 3] : vector<1x1x4x128xf32> to vector<1xf32>
    %387 = vector.shape_cast %386 : vector<1xf32> to vector<1x1x1x1xf32>
    %388 = vector.extract %387[0, 0, 0, 0] : f32 from vector<1x1x1x1xf32>
    %389 = arith.cmpf oge, %388, %32 : f32
    %390 = arith.select %389, %380, %373 : i32
    %391 = arith.select %389, %374, %380 : i32
    %c20_i32 = arith.constant 20 : i32
    %c1_i32_98 = arith.constant 1 : i32
    %392 = arith.shrsi %390, %c1_i32_98 : i32
    %c1_i32_99 = arith.constant 1 : i32
    %393 = arith.shrsi %391, %c1_i32_99 : i32
    %394 = arith.addi %392, %393 : i32
    %395 = arith.andi %390, %391 : i32
    %c1_i32_100 = arith.constant 1 : i32
    %396 = arith.andi %395, %c1_i32_100 : i32
    %397 = arith.addi %394, %396 : i32
    %398 = vector.broadcast %397 : i32 to vector<1x4x128xi32>
    %399 = arith.cmpi sgt, %40, %398 : vector<1x4x128xi32>
    %400 = arith.extui %399 : vector<1x4x128xi1> to vector<1x4x128xi32>
    %401 = arith.sitofp %400 : vector<1x4x128xi32> to vector<1x4x128xf32>
    %402 = vector.shape_cast %401 : vector<1x4x128xf32> to vector<1x1x4x128xf32>
    %cst_101 = arith.constant dense<0.000000e+00> : vector<1xf32>
    %403 = vector.multi_reduction <add>, %402, %cst_101 [1, 2, 3] : vector<1x1x4x128xf32> to vector<1xf32>
    %404 = vector.shape_cast %403 : vector<1xf32> to vector<1x1x1x1xf32>
    %405 = vector.extract %404[0, 0, 0, 0] : f32 from vector<1x1x1x1xf32>
    %406 = arith.cmpf oge, %405, %32 : f32
    %407 = arith.select %406, %397, %390 : i32
    %408 = arith.select %406, %391, %397 : i32
    %c21_i32 = arith.constant 21 : i32
    %c1_i32_102 = arith.constant 1 : i32
    %409 = arith.shrsi %407, %c1_i32_102 : i32
    %c1_i32_103 = arith.constant 1 : i32
    %410 = arith.shrsi %408, %c1_i32_103 : i32
    %411 = arith.addi %409, %410 : i32
    %412 = arith.andi %407, %408 : i32
    %c1_i32_104 = arith.constant 1 : i32
    %413 = arith.andi %412, %c1_i32_104 : i32
    %414 = arith.addi %411, %413 : i32
    %415 = vector.broadcast %414 : i32 to vector<1x4x128xi32>
    %416 = arith.cmpi sgt, %40, %415 : vector<1x4x128xi32>
    %417 = arith.extui %416 : vector<1x4x128xi1> to vector<1x4x128xi32>
    %418 = arith.sitofp %417 : vector<1x4x128xi32> to vector<1x4x128xf32>
    %419 = vector.shape_cast %418 : vector<1x4x128xf32> to vector<1x1x4x128xf32>
    %cst_105 = arith.constant dense<0.000000e+00> : vector<1xf32>
    %420 = vector.multi_reduction <add>, %419, %cst_105 [1, 2, 3] : vector<1x1x4x128xf32> to vector<1xf32>
    %421 = vector.shape_cast %420 : vector<1xf32> to vector<1x1x1x1xf32>
    %422 = vector.extract %421[0, 0, 0, 0] : f32 from vector<1x1x1x1xf32>
    %423 = arith.cmpf oge, %422, %32 : f32
    %424 = arith.select %423, %414, %407 : i32
    %425 = arith.select %423, %408, %414 : i32
    %c22_i32 = arith.constant 22 : i32
    %c1_i32_106 = arith.constant 1 : i32
    %426 = arith.shrsi %424, %c1_i32_106 : i32
    %c1_i32_107 = arith.constant 1 : i32
    %427 = arith.shrsi %425, %c1_i32_107 : i32
    %428 = arith.addi %426, %427 : i32
    %429 = arith.andi %424, %425 : i32
    %c1_i32_108 = arith.constant 1 : i32
    %430 = arith.andi %429, %c1_i32_108 : i32
    %431 = arith.addi %428, %430 : i32
    %432 = vector.broadcast %431 : i32 to vector<1x4x128xi32>
    %433 = arith.cmpi sgt, %40, %432 : vector<1x4x128xi32>
    %434 = arith.extui %433 : vector<1x4x128xi1> to vector<1x4x128xi32>
    %435 = arith.sitofp %434 : vector<1x4x128xi32> to vector<1x4x128xf32>
    %436 = vector.shape_cast %435 : vector<1x4x128xf32> to vector<1x1x4x128xf32>
    %cst_109 = arith.constant dense<0.000000e+00> : vector<1xf32>
    %437 = vector.multi_reduction <add>, %436, %cst_109 [1, 2, 3] : vector<1x1x4x128xf32> to vector<1xf32>
    %438 = vector.shape_cast %437 : vector<1xf32> to vector<1x1x1x1xf32>
    %439 = vector.extract %438[0, 0, 0, 0] : f32 from vector<1x1x1x1xf32>
    %440 = arith.cmpf oge, %439, %32 : f32
    %441 = arith.select %440, %431, %424 : i32
    %442 = arith.select %440, %425, %431 : i32
    %c23_i32 = arith.constant 23 : i32
    %c1_i32_110 = arith.constant 1 : i32
    %443 = arith.shrsi %441, %c1_i32_110 : i32
    %c1_i32_111 = arith.constant 1 : i32
    %444 = arith.shrsi %442, %c1_i32_111 : i32
    %445 = arith.addi %443, %444 : i32
    %446 = arith.andi %441, %442 : i32
    %c1_i32_112 = arith.constant 1 : i32
    %447 = arith.andi %446, %c1_i32_112 : i32
    %448 = arith.addi %445, %447 : i32
    %449 = vector.broadcast %448 : i32 to vector<1x4x128xi32>
    %450 = arith.cmpi sgt, %40, %449 : vector<1x4x128xi32>
    %451 = arith.extui %450 : vector<1x4x128xi1> to vector<1x4x128xi32>
    %452 = arith.sitofp %451 : vector<1x4x128xi32> to vector<1x4x128xf32>
    %453 = vector.shape_cast %452 : vector<1x4x128xf32> to vector<1x1x4x128xf32>
    %cst_113 = arith.constant dense<0.000000e+00> : vector<1xf32>
    %454 = vector.multi_reduction <add>, %453, %cst_113 [1, 2, 3] : vector<1x1x4x128xf32> to vector<1xf32>
    %455 = vector.shape_cast %454 : vector<1xf32> to vector<1x1x1x1xf32>
    %456 = vector.extract %455[0, 0, 0, 0] : f32 from vector<1x1x1x1xf32>
    %457 = arith.cmpf oge, %456, %32 : f32
    %458 = arith.select %457, %448, %441 : i32
    %459 = arith.select %457, %442, %448 : i32
    %c24_i32 = arith.constant 24 : i32
    %c1_i32_114 = arith.constant 1 : i32
    %460 = arith.shrsi %458, %c1_i32_114 : i32
    %c1_i32_115 = arith.constant 1 : i32
    %461 = arith.shrsi %459, %c1_i32_115 : i32
    %462 = arith.addi %460, %461 : i32
    %463 = arith.andi %458, %459 : i32
    %c1_i32_116 = arith.constant 1 : i32
    %464 = arith.andi %463, %c1_i32_116 : i32
    %465 = arith.addi %462, %464 : i32
    %466 = vector.broadcast %465 : i32 to vector<1x4x128xi32>
    %467 = arith.cmpi sgt, %40, %466 : vector<1x4x128xi32>
    %468 = arith.extui %467 : vector<1x4x128xi1> to vector<1x4x128xi32>
    %469 = arith.sitofp %468 : vector<1x4x128xi32> to vector<1x4x128xf32>
    %470 = vector.shape_cast %469 : vector<1x4x128xf32> to vector<1x1x4x128xf32>
    %cst_117 = arith.constant dense<0.000000e+00> : vector<1xf32>
    %471 = vector.multi_reduction <add>, %470, %cst_117 [1, 2, 3] : vector<1x1x4x128xf32> to vector<1xf32>
    %472 = vector.shape_cast %471 : vector<1xf32> to vector<1x1x1x1xf32>
    %473 = vector.extract %472[0, 0, 0, 0] : f32 from vector<1x1x1x1xf32>
    %474 = arith.cmpf oge, %473, %32 : f32
    %475 = arith.select %474, %465, %458 : i32
    %476 = arith.select %474, %459, %465 : i32
    %c25_i32 = arith.constant 25 : i32
    %c1_i32_118 = arith.constant 1 : i32
    %477 = arith.shrsi %475, %c1_i32_118 : i32
    %c1_i32_119 = arith.constant 1 : i32
    %478 = arith.shrsi %476, %c1_i32_119 : i32
    %479 = arith.addi %477, %478 : i32
    %480 = arith.andi %475, %476 : i32
    %c1_i32_120 = arith.constant 1 : i32
    %481 = arith.andi %480, %c1_i32_120 : i32
    %482 = arith.addi %479, %481 : i32
    %483 = vector.broadcast %482 : i32 to vector<1x4x128xi32>
    %484 = arith.cmpi sgt, %40, %483 : vector<1x4x128xi32>
    %485 = arith.extui %484 : vector<1x4x128xi1> to vector<1x4x128xi32>
    %486 = arith.sitofp %485 : vector<1x4x128xi32> to vector<1x4x128xf32>
    %487 = vector.shape_cast %486 : vector<1x4x128xf32> to vector<1x1x4x128xf32>
    %cst_121 = arith.constant dense<0.000000e+00> : vector<1xf32>
    %488 = vector.multi_reduction <add>, %487, %cst_121 [1, 2, 3] : vector<1x1x4x128xf32> to vector<1xf32>
    %489 = vector.shape_cast %488 : vector<1xf32> to vector<1x1x1x1xf32>
    %490 = vector.extract %489[0, 0, 0, 0] : f32 from vector<1x1x1x1xf32>
    %491 = arith.cmpf oge, %490, %32 : f32
    %492 = arith.select %491, %482, %475 : i32
    %493 = arith.select %491, %476, %482 : i32
    %c26_i32 = arith.constant 26 : i32
    %c1_i32_122 = arith.constant 1 : i32
    %494 = arith.shrsi %492, %c1_i32_122 : i32
    %c1_i32_123 = arith.constant 1 : i32
    %495 = arith.shrsi %493, %c1_i32_123 : i32
    %496 = arith.addi %494, %495 : i32
    %497 = arith.andi %492, %493 : i32
    %c1_i32_124 = arith.constant 1 : i32
    %498 = arith.andi %497, %c1_i32_124 : i32
    %499 = arith.addi %496, %498 : i32
    %500 = vector.broadcast %499 : i32 to vector<1x4x128xi32>
    %501 = arith.cmpi sgt, %40, %500 : vector<1x4x128xi32>
    %502 = arith.extui %501 : vector<1x4x128xi1> to vector<1x4x128xi32>
    %503 = arith.sitofp %502 : vector<1x4x128xi32> to vector<1x4x128xf32>
    %504 = vector.shape_cast %503 : vector<1x4x128xf32> to vector<1x1x4x128xf32>
    %cst_125 = arith.constant dense<0.000000e+00> : vector<1xf32>
    %505 = vector.multi_reduction <add>, %504, %cst_125 [1, 2, 3] : vector<1x1x4x128xf32> to vector<1xf32>
    %506 = vector.shape_cast %505 : vector<1xf32> to vector<1x1x1x1xf32>
    %507 = vector.extract %506[0, 0, 0, 0] : f32 from vector<1x1x1x1xf32>
    %508 = arith.cmpf oge, %507, %32 : f32
    %509 = arith.select %508, %499, %492 : i32
    %510 = arith.select %508, %493, %499 : i32
    %c27_i32 = arith.constant 27 : i32
    %c1_i32_126 = arith.constant 1 : i32
    %511 = arith.shrsi %509, %c1_i32_126 : i32
    %c1_i32_127 = arith.constant 1 : i32
    %512 = arith.shrsi %510, %c1_i32_127 : i32
    %513 = arith.addi %511, %512 : i32
    %514 = arith.andi %509, %510 : i32
    %c1_i32_128 = arith.constant 1 : i32
    %515 = arith.andi %514, %c1_i32_128 : i32
    %516 = arith.addi %513, %515 : i32
    %517 = vector.broadcast %516 : i32 to vector<1x4x128xi32>
    %518 = arith.cmpi sgt, %40, %517 : vector<1x4x128xi32>
    %519 = arith.extui %518 : vector<1x4x128xi1> to vector<1x4x128xi32>
    %520 = arith.sitofp %519 : vector<1x4x128xi32> to vector<1x4x128xf32>
    %521 = vector.shape_cast %520 : vector<1x4x128xf32> to vector<1x1x4x128xf32>
    %cst_129 = arith.constant dense<0.000000e+00> : vector<1xf32>
    %522 = vector.multi_reduction <add>, %521, %cst_129 [1, 2, 3] : vector<1x1x4x128xf32> to vector<1xf32>
    %523 = vector.shape_cast %522 : vector<1xf32> to vector<1x1x1x1xf32>
    %524 = vector.extract %523[0, 0, 0, 0] : f32 from vector<1x1x1x1xf32>
    %525 = arith.cmpf oge, %524, %32 : f32
    %526 = arith.select %525, %516, %509 : i32
    %527 = arith.select %525, %510, %516 : i32
    %c28_i32 = arith.constant 28 : i32
    %c1_i32_130 = arith.constant 1 : i32
    %528 = arith.shrsi %526, %c1_i32_130 : i32
    %c1_i32_131 = arith.constant 1 : i32
    %529 = arith.shrsi %527, %c1_i32_131 : i32
    %530 = arith.addi %528, %529 : i32
    %531 = arith.andi %526, %527 : i32
    %c1_i32_132 = arith.constant 1 : i32
    %532 = arith.andi %531, %c1_i32_132 : i32
    %533 = arith.addi %530, %532 : i32
    %534 = vector.broadcast %533 : i32 to vector<1x4x128xi32>
    %535 = arith.cmpi sgt, %40, %534 : vector<1x4x128xi32>
    %536 = arith.extui %535 : vector<1x4x128xi1> to vector<1x4x128xi32>
    %537 = arith.sitofp %536 : vector<1x4x128xi32> to vector<1x4x128xf32>
    %538 = vector.shape_cast %537 : vector<1x4x128xf32> to vector<1x1x4x128xf32>
    %cst_133 = arith.constant dense<0.000000e+00> : vector<1xf32>
    %539 = vector.multi_reduction <add>, %538, %cst_133 [1, 2, 3] : vector<1x1x4x128xf32> to vector<1xf32>
    %540 = vector.shape_cast %539 : vector<1xf32> to vector<1x1x1x1xf32>
    %541 = vector.extract %540[0, 0, 0, 0] : f32 from vector<1x1x1x1xf32>
    %542 = arith.cmpf oge, %541, %32 : f32
    %543 = arith.select %542, %533, %526 : i32
    %544 = arith.select %542, %527, %533 : i32
    %c29_i32 = arith.constant 29 : i32
    %c1_i32_134 = arith.constant 1 : i32
    %545 = arith.shrsi %543, %c1_i32_134 : i32
    %c1_i32_135 = arith.constant 1 : i32
    %546 = arith.shrsi %544, %c1_i32_135 : i32
    %547 = arith.addi %545, %546 : i32
    %548 = arith.andi %543, %544 : i32
    %c1_i32_136 = arith.constant 1 : i32
    %549 = arith.andi %548, %c1_i32_136 : i32
    %550 = arith.addi %547, %549 : i32
    %551 = vector.broadcast %550 : i32 to vector<1x4x128xi32>
    %552 = arith.cmpi sgt, %40, %551 : vector<1x4x128xi32>
    %553 = arith.extui %552 : vector<1x4x128xi1> to vector<1x4x128xi32>
    %554 = arith.sitofp %553 : vector<1x4x128xi32> to vector<1x4x128xf32>
    %555 = vector.shape_cast %554 : vector<1x4x128xf32> to vector<1x1x4x128xf32>
    %cst_137 = arith.constant dense<0.000000e+00> : vector<1xf32>
    %556 = vector.multi_reduction <add>, %555, %cst_137 [1, 2, 3] : vector<1x1x4x128xf32> to vector<1xf32>
    %557 = vector.shape_cast %556 : vector<1xf32> to vector<1x1x1x1xf32>
    %558 = vector.extract %557[0, 0, 0, 0] : f32 from vector<1x1x1x1xf32>
    %559 = arith.cmpf oge, %558, %32 : f32
    %560 = arith.select %559, %550, %543 : i32
    %561 = arith.select %559, %544, %550 : i32
    %c30_i32 = arith.constant 30 : i32
    %c1_i32_138 = arith.constant 1 : i32
    %562 = arith.shrsi %560, %c1_i32_138 : i32
    %c1_i32_139 = arith.constant 1 : i32
    %563 = arith.shrsi %561, %c1_i32_139 : i32
    %564 = arith.addi %562, %563 : i32
    %565 = arith.andi %560, %561 : i32
    %c1_i32_140 = arith.constant 1 : i32
    %566 = arith.andi %565, %c1_i32_140 : i32
    %567 = arith.addi %564, %566 : i32
    %568 = vector.broadcast %567 : i32 to vector<1x4x128xi32>
    %569 = arith.cmpi sgt, %40, %568 : vector<1x4x128xi32>
    %570 = arith.extui %569 : vector<1x4x128xi1> to vector<1x4x128xi32>
    %571 = arith.sitofp %570 : vector<1x4x128xi32> to vector<1x4x128xf32>
    %572 = vector.shape_cast %571 : vector<1x4x128xf32> to vector<1x1x4x128xf32>
    %cst_141 = arith.constant dense<0.000000e+00> : vector<1xf32>
    %573 = vector.multi_reduction <add>, %572, %cst_141 [1, 2, 3] : vector<1x1x4x128xf32> to vector<1xf32>
    %574 = vector.shape_cast %573 : vector<1xf32> to vector<1x1x1x1xf32>
    %575 = vector.extract %574[0, 0, 0, 0] : f32 from vector<1x1x1x1xf32>
    %576 = arith.cmpf oge, %575, %32 : f32
    %577 = arith.select %576, %567, %560 : i32
    %578 = arith.select %576, %561, %567 : i32
    %c31_i32 = arith.constant 31 : i32
    %c1_i32_142 = arith.constant 1 : i32
    %579 = arith.shrsi %577, %c1_i32_142 : i32
    %c1_i32_143 = arith.constant 1 : i32
    %580 = arith.shrsi %578, %c1_i32_143 : i32
    %581 = arith.addi %579, %580 : i32
    %582 = arith.andi %577, %578 : i32
    %c1_i32_144 = arith.constant 1 : i32
    %583 = arith.andi %582, %c1_i32_144 : i32
    %584 = arith.addi %581, %583 : i32
    %585 = vector.broadcast %584 : i32 to vector<1x4x128xi32>
    %586 = arith.cmpi sgt, %40, %585 : vector<1x4x128xi32>
    %587 = arith.extui %586 : vector<1x4x128xi1> to vector<1x4x128xi32>
    %588 = arith.sitofp %587 : vector<1x4x128xi32> to vector<1x4x128xf32>
    %589 = vector.shape_cast %588 : vector<1x4x128xf32> to vector<1x1x4x128xf32>
    %cst_145 = arith.constant dense<0.000000e+00> : vector<1xf32>
    %590 = vector.multi_reduction <add>, %589, %cst_145 [1, 2, 3] : vector<1x1x4x128xf32> to vector<1xf32>
    %591 = vector.shape_cast %590 : vector<1xf32> to vector<1x1x1x1xf32>
    %592 = vector.extract %591[0, 0, 0, 0] : f32 from vector<1x1x1x1xf32>
    %593 = arith.cmpf oge, %592, %32 : f32
    %594 = arith.select %593, %584, %577 : i32
    %595 = arith.select %593, %578, %584 : i32
    %cst_146 = arith.constant 0.000000e+00 : f32
    %596 = arith.cmpf ogt, %18, %cst_146 : f32
    %597 = vector.broadcast %595 : i32 to vector<1x4x128xi32>
    %598 = arith.cmpi sle, %38, %597 : vector<1x4x128xi32>
    %599 = arith.andi %6, %598 : vector<1x4x128xi1>
    %cst_147 = arith.constant -3.000000e+38 : f32
    %600 = vector.broadcast %cst_147 : f32 to vector<1x4x128xf32>
    %601 = arith.select %599, %2, %600 : vector<1x4x128xi1>, vector<1x4x128xf32>
    %602 = vector.shape_cast %601 : vector<1x4x128xf32> to vector<1x1x4x128xf32>
    %cst_148 = arith.constant dense<0xFF800000> : vector<1xf32>
    %603 = vector.multi_reduction <maximumf>, %602, %cst_148 [1, 2, 3] : vector<1x1x4x128xf32> to vector<1xf32>
    %604 = vector.shape_cast %603 : vector<1xf32> to vector<1x1x1x1xf32>
    %605 = vector.extract %604[0, 0, 0, 0] : f32 from vector<1x1x1x1xf32>
    %cst_149 = arith.constant 0.000000e+00 : f32
    %606 = arith.select %596, %605, %cst_149 : f32
    %cst_150 = arith.constant -3.000000e+38 : f32
    %607 = vector.broadcast %cst_150 : f32 to vector<1x4x128xf32>
    %608 = arith.select %6, %2, %607 : vector<1x4x128xi1>, vector<1x4x128xf32>
    %609 = vector.shape_cast %608 : vector<1x4x128xf32> to vector<1x1x4x128xf32>
    %cst_151 = arith.constant dense<0xFF800000> : vector<1xf32>
    %610 = vector.multi_reduction <maximumf>, %609, %cst_151 [1, 2, 3] : vector<1x1x4x128xf32> to vector<1xf32>
    %611 = vector.shape_cast %610 : vector<1xf32> to vector<1x1x1x1xf32>
    %612 = vector.extract %611[0, 0, 0, 0] : f32 from vector<1x1x1x1xf32>
    %cst_152 = arith.constant 0.000000e+00 : f32
    %613 = arith.select %596, %612, %cst_152 : f32
    %614 = vector.broadcast %606 : f32 to vector<1x4x128xf32>
    %615 = arith.cmpf ogt, %2, %614 : vector<1x4x128xf32>
    %616 = arith.andi %6, %615 : vector<1x4x128xi1>
    %617 = arith.extui %616 : vector<1x4x128xi1> to vector<1x4x128xi32>
    %618 = arith.sitofp %617 : vector<1x4x128xi32> to vector<1x4x128xf32>
    %619 = vector.broadcast %613 : f32 to vector<1x4x128xf32>
    %620 = arith.select %616, %2, %619 : vector<1x4x128xi1>, vector<1x4x128xf32>
    %621 = vector.broadcast %613 : f32 to vector<1x4x128xf32>
    %622 = arith.subf %620, %621 : vector<1x4x128xf32>
    %623 = math.exp %622 : vector<1x4x128xf32>
    %624 = vector.shape_cast %618 : vector<1x4x128xf32> to vector<1x1x4x128xf32>
    %cst_153 = arith.constant dense<0.000000e+00> : vector<1xf32>
    %625 = vector.multi_reduction <add>, %624, %cst_153 [1, 2, 3] : vector<1x1x4x128xf32> to vector<1xf32>
    %626 = vector.shape_cast %625 : vector<1xf32> to vector<1x1x1x1xf32>
    %627 = vector.extract %626[0, 0, 0, 0] : f32 from vector<1x1x1x1xf32>
    %628 = arith.mulf %618, %623 : vector<1x4x128xf32>
    %629 = vector.shape_cast %628 : vector<1x4x128xf32> to vector<1x1x4x128xf32>
    %cst_154 = arith.constant dense<0.000000e+00> : vector<1xf32>
    %630 = vector.multi_reduction <add>, %629, %cst_154 [1, 2, 3] : vector<1x1x4x128xf32> to vector<1xf32>
    %631 = vector.shape_cast %630 : vector<1xf32> to vector<1x1x1x1xf32>
    %632 = vector.extract %631[0, 0, 0, 0] : f32 from vector<1x1x1x1xf32>
    %633 = arith.mulf %618, %2 : vector<1x4x128xf32>
    %634 = arith.mulf %633, %623 : vector<1x4x128xf32>
    %635 = vector.shape_cast %634 : vector<1x4x128xf32> to vector<1x1x4x128xf32>
    %cst_155 = arith.constant dense<0.000000e+00> : vector<1xf32>
    %636 = vector.multi_reduction <add>, %635, %cst_155 [1, 2, 3] : vector<1x1x4x128xf32> to vector<1xf32>
    %637 = vector.shape_cast %636 : vector<1xf32> to vector<1x1x1x1xf32>
    %638 = vector.extract %637[0, 0, 0, 0] : f32 from vector<1x1x1x1xf32>
    %639 = arith.subf %32, %627 : f32
    %cst_156 = arith.constant 0.000000e+00 : f32
    %640 = arith.maximumf %639, %cst_156 : f32
    %641 = arith.subf %606, %613 : f32
    %642 = math.exp %641 : f32
    %643 = arith.mulf %640, %642 : f32
    %644 = arith.addf %632, %643 : f32
    %645 = arith.mulf %640, %606 : f32
    %646 = arith.mulf %645, %642 : f32
    %647 = arith.addf %638, %646 : f32
    %cst_157 = arith.constant 1.000000e-30 : f32
    %648 = arith.maximumf %644, %cst_157 : f32
    %649 = arith.divf %647, %648 : f32
    %650 = arith.mulf %2, %8 : vector<1x4x128xf32>
    %651 = vector.shape_cast %650 : vector<1x4x128xf32> to vector<1x1x4x128xf32>
    %cst_158 = arith.constant dense<0.000000e+00> : vector<1xf32>
    %652 = vector.multi_reduction <add>, %651, %cst_158 [1, 2, 3] : vector<1x1x4x128xf32> to vector<1xf32>
    %653 = vector.shape_cast %652 : vector<1xf32> to vector<1x1x1x1xf32>
    %654 = vector.extract %653[0, 0, 0, 0] : f32 from vector<1x1x1x1xf32>
    %cst_159 = arith.constant 1.000000e+00 : f32
    %655 = arith.maximumf %14, %cst_159 : f32
    %656 = arith.divf %654, %655 : f32
    %cst_160 = arith.constant 0.000000e+00 : f32
    %657 = arith.cmpf ogt, %14, %cst_160 : f32
    %cst_161 = arith.constant 1.000000e+00 : f32
    %658 = arith.select %657, %656, %cst_161 : f32
    %659 = arith.subf %649, %658 : f32
    %cst_162 = arith.constant 5.000000e-01 : f32
    %660 = arith.addf %659, %cst_162 : f32
    %cst_163 = arith.constant 4.000000e+00 : f32
    %661 = arith.mulf %cst_163, %660 : f32
    %662 = math.exp %661 : f32
    %cst_164 = arith.constant 1.000000e+00 : f32
    %663 = arith.addf %cst_164, %662 : f32
    %664 = math.log %663 : f32
    %cst_165 = arith.constant 4.000000e+00 : f32
    %665 = arith.divf %664, %cst_165 : f32
    %cst_166 = arith.constant 0.000000e+00 : f32
    %666 = arith.cmpf ogt, %27, %cst_166 : f32
    %cst_167 = arith.constant 0.000000e+00 : f32
    %667 = arith.select %666, %665, %cst_167 : f32
    %668 = tpu.iota {dimensions = array<i32: 2>} : vector<1x1x128xi32>
    %c0_i32_168 = arith.constant 0 : i32
    %669 = vector.broadcast %c0_i32_168 : i32 to vector<1x1x128xi32>
    %670 = arith.cmpi eq, %668, %669 : vector<1x1x128xi32>
    %c1_i32_169 = arith.constant 1 : i32
    %671 = vector.broadcast %c1_i32_169 : i32 to vector<1x1x128xi32>
    %672 = arith.cmpi eq, %668, %671 : vector<1x1x128xi32>
    %673 = arith.extui %666 : i1 to i32
    %674 = arith.sitofp %673 : i32 to f32
    %cst_170 = arith.constant 0.000000e+00 : f32
    %675 = vector.broadcast %674 : f32 to vector<1x1x128xf32>
    %676 = vector.broadcast %cst_170 : f32 to vector<1x1x128xf32>
    %677 = arith.select %672, %675, %676 : vector<1x1x128xi1>, vector<1x1x128xf32>
    %678 = vector.broadcast %667 : f32 to vector<1x1x128xf32>
    %679 = arith.select %670, %678, %677 : vector<1x1x128xi1>, vector<1x1x128xf32>
    %c0_171 = arith.constant 0 : index
    %c0_172 = arith.constant 0 : index
    %c0_173 = arith.constant 0 : index
    %680 = vector.load %arg3[%c0_171, %c0_172, %c0_173] : memref<1x1x128xf32, #tpu.memory_space<vmem>>, vector<1x1x128xf32>
    tpu.vector_store %arg3[%c0_171, %c0_172, %c0_173], %679 {strides = array<i32>} : memref<1x1x128xf32, #tpu.memory_space<vmem>>, vector<1x1x128xf32>,
    return
  }
  func.func @transform_0(%arg0: i32) -> (i32, i32, i32) {
    %c0_i32 = arith.constant 0 : i32
    %c0_i32_0 = arith.constant 0 : i32
    %c0_i32_1 = arith.constant 0 : i32
    return %arg0, %c0_i32, %c0_i32_0 : i32, i32, i32
  }
  func.func @transform_1(%arg0: i32) -> (i32, i32, i32) {
    %c0_i32 = arith.constant 0 : i32
    %c0_i32_0 = arith.constant 0 : i32
    %c0_i32_1 = arith.constant 0 : i32
    return %arg0, %c0_i32, %c0_i32_0 : i32, i32, i32
  }
  func.func @transform_2(%arg0: i32) -> (i32, i32, i32) {
    %c0_i32 = arith.constant 0 : i32
    %c0_i32_0 = arith.constant 0 : i32
    %c0_i32_1 = arith.constant 0 : i32
    return %arg0, %c0_i32, %c0_i32_0 : i32, i32, i32
  }
}

</mosaic_0001>

<llo_original>
// kernel: tpu_custom_call.1
$region0: #{tpu_custom_call.1}
  #allocation0 [shape = 'u32[]', space=smem, size = 0x4, offset = 0x4, fixed_abs, tag = 'smem constant byte address 0x4 - core index']
  #allocation1 [shape = 'u32[144,128]{1,0:T(1,128)}', space=vmem, size = 0x12000, scoped, tag = 'internal scratch']
  %s0 = inlined_call_operand.hbm [shape: f32[2,4,128], index: 0, kind: input, shape index: {}]
  %s1 = inlined_call_operand.hbm [shape: f32[2,4,128], index: 1, kind: input, shape index: {}]
  %s2 = inlined_call_operand.hbm [shape: f32[2,1,128], index: 2, kind: output, shape index: {}]
  %s3 = sld [smem:[#allocation0]]
  $region49: #{tpu_custom_call.1} parent=0
    _
  %s5 = ssub.s32 1, %s3
  %s6 = scalar_select 0, %s5, %s3
  $region1: #{tpu_custom_call.1} parent=0
    #allocation2 [shape = 'u8[4096]{0}', space=vmem, size = 0x1000, scoped, tag = 'input window, operand 0']
    #allocation3 [shape = 's32[2]{0}', space=sflag, size = 0x8, scoped, tag = 'scoped memory for tpu_custom_call.1']
    #allocation4 [shape = 's32[2]{0}', space=sflag, size = 0x8, scoped, tag = 'scoped memory for tpu_custom_call.1']
    #allocation5 [shape = 'u8[4096]{0}', space=vmem, size = 0x1000, scoped, tag = 'input window, operand 1']
    #allocation6 [shape = 's32[2]{0}', space=sflag, size = 0x8, scoped, tag = 'scoped memory for tpu_custom_call.1']
    #allocation7 [shape = 'u8[1024]{0}', space=vmem, size = 0x400, scoped, tag = 'output window, operand 0']
    %7 = vsyncpa [#allocation3], 0
    %s8 = scalar_lea.sflag [#allocation3], 1
    %9 = vsyncpa %s8, 0
    %10 = vsyncpa [#allocation6], 0
    %s11 = scalar_lea.sflag [#allocation6], 1
    %12 = vsyncpa %s11, 0
    %13 = vsyncpa [#allocation4], 0
    %s14 = scalar_lea.sflag [#allocation4], 1
    %15 = vsyncpa %s14, 0
    loop: start=0, step=1, limit=4
    $region2: #{tpu_custom_call.1} parent=1 // loop_pre_header
      _
    $region3: #{tpu_custom_call.1} parent=1 // loop_header
      %s17 = sphi 0, %s21
      %p18 = scmp.ge.s32.totalorder %s17, 4
      %s27 = sphi 0, %s29
      %s30 = sphi 0, %s27
      %s31 = sphi 0, %s30
      %s47 = sphi 0, %s31
      %s53 = sphi 0, %s55
      %s56 = sphi 0, %s53
      %s57 = sphi 0, %s56
      %s73 = sphi 0, %s57
      %s79 = sphi 0, %s81
      %s82 = sphi 0, %s79
      %s83 = sphi 0, %s82
      %s99 = sphi 0, %s83
    $region4: #{tpu_custom_call.1} parent=1 // loop_header_branch
      %20 = sbr.rel (%p18) target = $region8
    $region5: #{tpu_custom_call.1} parent=1 // loop_body
      %s22 = ssub.s32 %s17, 1
      %s23 = ssub.s32 %s17, 2
      %s24 = sadd.s32 %s17, 1
      %s25 = ssub.s32 %s17, %s24
      %p26 = scmp.eq.s32.totalorder %s25, 0
      %s28 = sadd.s32 %s27, 1
      %s29 = scalar_select %p26, %s27, %s28
      %p32 = pneg %p26
      %p33 = scmp.eq.s32.totalorder %s17, 1
      %p34 = por %p32, %p33
      %p35 = scmp.ne.s32.totalorder %s27, %s30
      %p36 = scmp.eq.s32.totalorder %s17, 0
      %p37 = por %p35, %p36
      %p38 = scmp.ne.s32.totalorder %s27, %s30
      %p39 = scmp.eq.s32.totalorder %s22, 1
      %p40 = por %p38, %p39
      %p41 = scmp.ne.s32.totalorder %s30, %s31
      %p42 = scmp.eq.s32.totalorder %s22, 0
      %p43 = por %p41, %p42
      %p44 = scmp.ne.s32.totalorder %s30, %s31
      %p45 = scmp.eq.s32.totalorder %s23, 1
      %p46 = por %p44, %p45
      %p48 = scmp.ne.s32.totalorder %s31, %s47
      %p49 = scmp.eq.s32.totalorder %s23, 0
      %p50 = por %p48, %p49
      %s51 = ssub.s32 %s17, %s24
      %p52 = scmp.eq.s32.totalorder %s51, 0
      %s54 = sadd.s32 %s53, 1
      %s55 = scalar_select %p52, %s53, %s54
      %p58 = pneg %p52
      %p59 = scmp.eq.s32.totalorder %s17, 1
      %p60 = por %p58, %p59
      %p61 = scmp.ne.s32.totalorder %s53, %s56
      %p62 = scmp.eq.s32.totalorder %s17, 0
      %p63 = por %p61, %p62
      %p64 = scmp.ne.s32.totalorder %s53, %s56
      %p65 = scmp.eq.s32.totalorder %s22, 1
      %p66 = por %p64, %p65
      %p67 = scmp.ne.s32.totalorder %s56, %s57
      %p68 = scmp.eq.s32.totalorder %s22, 0
      %p69 = por %p67, %p68
      %p70 = scmp.ne.s32.totalorder %s56, %s57
      %p71 = scmp.eq.s32.totalorder %s23, 1
      %p72 = por %p70, %p71
      %p74 = scmp.ne.s32.totalorder %s57, %s73
      %p75 = scmp.eq.s32.totalorder %s23, 0
      %p76 = por %p74, %p75
      %s77 = ssub.s32 %s17, %s24
      %p78 = scmp.eq.s32.totalorder %s77, 0
      %s80 = sadd.s32 %s79, 1
      %s81 = scalar_select %p78, %s79, %s80
      %p84 = pneg %p78
      %p85 = scmp.eq.s32.totalorder %s17, 1
      %p86 = por %p84, %p85
      %p87 = scmp.ne.s32.totalorder %s79, %s82
      %p88 = scmp.eq.s32.totalorder %s17, 0
      %p89 = por %p87, %p88
      %p90 = scmp.ne.s32.totalorder %s79, %s82
      %p91 = scmp.eq.s32.totalorder %s22, 1
      %p92 = por %p90, %p91
      %p93 = scmp.ne.s32.totalorder %s82, %s83
      %p94 = scmp.eq.s32.totalorder %s22, 0
      %p95 = por %p93, %p94
      %p96 = scmp.ne.s32.totalorder %s82, %s83
      %p97 = scmp.eq.s32.totalorder %s23, 1
      %p98 = por %p96, %p97
      %p100 = scmp.ne.s32.totalorder %s83, %s99
      %p101 = scmp.eq.s32.totalorder %s23, 0
      %p102 = por %p100, %p101
      %p103 = scmp.le.s32.totalorder 1, %s17
      %p104 = scmp.lt.s32.totalorder %s17, 3
      %p105 = pnand %p103, %p104
      %p106 = pneg %p105
      // Predicated region
      $region9: #{tpu_custom_call.1} parent=5 // pred_check
        _
      $region10: #{tpu_custom_call.1} parent=5 // pred_check_branch
        %108 = sbr.rel (%p105) target = $region12
      $region11: #{tpu_custom_call.1} parent=5 // pred_region
        %s109 = ssub.s32 %s17, 1
      $region12: #{tpu_custom_call.1} parent=5 // pred_fallthru
        _
      %p110 = scmp.lt.s32.totalorder %s17, 2
      // Predicated region
      $region13: #{tpu_custom_call.1} parent=5 // pred_check
        %p111 = pneg %p110
      $region14: #{tpu_custom_call.1} parent=5 // pred_check_branch
        %113 = sbr.rel (%p111) target = $region16
      $region15: #{tpu_custom_call.1} parent=5 // pred_region
        // Predicated region
        $region17: #{tpu_custom_call.1} parent=15 // pred_check
          %p114 = pneg %p37
        $region18: #{tpu_custom_call.1} parent=15 // pred_check_branch
          %116 = sbr.rel (%p114) target = $region20
        $region19: #{tpu_custom_call.1} parent=15 // pred_region
          %s117 = sand.u32 %s27, 1
          %s118 = scalar_lea.sflag [#allocation3], %s117
          %s119 = sand.u32 %s27, 1
          %s120 = smul.addr %s119, 4
          %s121 = scalar_lea.vmem [#allocation2], %s120
          %s123 = ssub.s32 64, 64
          %124 = vsyncadd %s118, %s123
          %s125 = smul.addr %s17, 64
          %s126 = scalar_lea.hbm %s0, %s125
          %s128 = sshll.u32 %s121, 4
          %s129 = int_to_ptr.vmem [resolvable:$true] %s128
          %131 = dma.hbm_to_vmem [thread:$0]  %s126, 64, %s129, %s118
        $region20: #{tpu_custom_call.1} parent=15 // pred_fallthru
          _
        // Predicated region
        $region21: #{tpu_custom_call.1} parent=15 // pred_check
          %p132 = pneg %p63
        $region22: #{tpu_custom_call.1} parent=15 // pred_check_branch
          %134 = sbr.rel (%p132) target = $region24
        $region23: #{tpu_custom_call.1} parent=15 // pred_region
          %s135 = sand.u32 %s53, 1
          %s136 = scalar_lea.sflag [#allocation6], %s135
          %s137 = sand.u32 %s53, 1
          %s138 = smul.addr %s137, 4
          %s139 = scalar_lea.vmem [#allocation5], %s138
          %s141 = ssub.s32 64, 64
          %142 = vsyncadd %s136, %s141
          %s143 = smul.addr %s17, 64
          %s144 = scalar_lea.hbm %s1, %s143
          %s146 = sshll.u32 %s139, 4
          %s147 = int_to_ptr.vmem [resolvable:$true] %s146
          %149 = dma.hbm_to_vmem [thread:$0]  %s144, 64, %s147, %s136
        $region24: #{tpu_custom_call.1} parent=15 // pred_fallthru
          _
      $region16: #{tpu_custom_call.1} parent=5 // pred_fallthru
        _
      %p150 = scmp.le.s32.totalorder 1, %s17
      %p151 = scmp.lt.s32.totalorder %s17, 3
      %p152 = pnand %p150, %p151
      %p153 = pneg %p152
      // Predicated region
      $region25: #{tpu_custom_call.1} parent=5 // pred_check
        _
      $region26: #{tpu_custom_call.1} parent=5 // pred_check_branch
        %155 = sbr.rel (%p152) target = $region28
      $region27: #{tpu_custom_call.1} parent=5 // pred_region
        %s156 = ssub.s32 %s17, 1
        %s157 = sand.u32 %s30, 1
        %s158 = scalar_lea.sflag [#allocation3], %s157
        %s159 = sand.u32 %s30, 1
        %s160 = smul.addr %s159, 4
        %s161 = scalar_lea.vmem [#allocation2], %s160
        // Predicated region
        $region29: #{tpu_custom_call.1} parent=27 // pred_check
          %p162 = pneg %p43
        $region30: #{tpu_custom_call.1} parent=27 // pred_check_branch
          %164 = sbr.rel (%p162) target = $region32
        $region31: #{tpu_custom_call.1} parent=27 // pred_region
          %165 = dma.done %s158, 64
        $region32: #{tpu_custom_call.1} parent=27 // pred_fallthru
          _
        %s166 = sand.u32 %s56, 1
        %s167 = scalar_lea.sflag [#allocation6], %s166
        %s168 = sand.u32 %s56, 1
        %s169 = smul.addr %s168, 4
        %s170 = scalar_lea.vmem [#allocation5], %s169
        // Predicated region
        $region33: #{tpu_custom_call.1} parent=27 // pred_check
          %p171 = pneg %p69
        $region34: #{tpu_custom_call.1} parent=27 // pred_check_branch
          %173 = sbr.rel (%p171) target = $region36
        $region35: #{tpu_custom_call.1} parent=27 // pred_region
          %174 = dma.done %s167, 64
        $region36: #{tpu_custom_call.1} parent=27 // pred_fallthru
          _
        %s175 = sand.u32 %s30, 1
        %s176 = scalar_lea.sflag [#allocation3], %s175
        %s177 = sand.u32 %s30, 1
        %s178 = smul.addr %s177, 4
        %s179 = scalar_lea.vmem [#allocation2], %s178
        %p180 = pneg %p43
        %p181 = pneg %p40
        %s182 = sand.u32 %s56, 1
        %s183 = scalar_lea.sflag [#allocation6], %s182
        %s184 = sand.u32 %s56, 1
        %s185 = smul.addr %s184, 4
        %s186 = scalar_lea.vmem [#allocation5], %s185
        %p187 = pneg %p69
        %p188 = pneg %p66
        %p189 = pneg %p95
        %p190 = pneg %p92
        %s191 = sand.u32 %s82, 1
        %s192 = scalar_lea.sflag [#allocation4], %s191
        %s193 = sand.u32 %s82, 1
        %s194 = scalar_lea.vmem [#allocation7], %s193
        %v195 = vld [vmem:[%s161] sm:$0xf]
        %v196 = vld [vmem:[%s170] sm:$0xf]
        %v197 = vmul.f32 %v195, 1.442695
        %v198 = vpow.pop %v197
        %vm199 = vcmp.eq.f32.partialorder %v196, 1.0
        %vm200 = vcmp.eq.f32.partialorder %v196, 0.0
        %v201 = vsel %vm199, 1, 0
        %v202 = vcvt.s32.f32 %v201
        %v203 = vsel %vm200, 1, 0
        %v204 = vcvt.s32.f32 %v203
        %vm205 = vcmask 1043456
        %v206 = vsel %vm205, %v202, 0.0
        %207 = vadd.xlane.f32.xlu0 %v206
        %v208 = vpop.xlane.xlu0 %207
        %v209 = vrot.slane %v208, 4
        %v210 = vadd.f32 %v208, %v209
        %v211 = vrot.slane %v210, 2
        %v212 = vadd.f32 %v210, %v211
        %v213 = vrot.slane %v212, 1
        %v214 = vadd.f32 %v212, %v213
        %s215 = vtos %v214
        %v216 = vsel %vm205, %v204, 0.0
        %217 = vadd.xlane.f32.xlu0 %v216
        %v218 = vpop.xlane.xlu0 %217
        %v219 = vrot.slane %v218, 4
        %v220 = vadd.f32 %v218, %v219
        %v221 = vrot.slane %v220, 2
        %v222 = vadd.f32 %v220, %v221
        %v223 = vrot.slane %v222, 1
        %v224 = vadd.f32 %v222, %v223
        %s225 = vtos %v224
        %vm226 = vcmp.gt.f32.partialorder %v198, 0.5
        %vm227 = vmand %vm200, %vm226
        %v228 = vsel %vm227, 1, 0
        %v229 = vcvt.s32.f32 %v228
        %v230 = vsel %vm205, %v229, 0.0
        %231 = vadd.xlane.f32.xlu0 %v230
        %v232 = vpop.xlane.xlu0 %231
        %v233 = vrot.slane %v232, 4
        %v234 = vadd.f32 %v232, %v233
        %v235 = vrot.slane %v234, 2
        %v236 = vadd.f32 %v234, %v235
        %v237 = vrot.slane %v236, 1
        %v238 = vadd.f32 %v236, %v237
        %s239 = vtos %v238
        %p240 = scmp.gt.f32.partialorder %s215, 0.0
        %s241 = smax.f32 %s239, 8.0
        %s242 = scalar_select %p240, %s215, %s241
        %s243 = smin.f32 %s242, %s225
        %s244 = smax.f32 %s243, 1.0
        %vm246 = vcmp.ge.s32.totalorder %v198, 0
        %v247 = vxor.u32 %v198, 2147483647
        %v248 = vsel %vm246, %v198, %v247
        %v249 = vsel %vm200, %v248, 2147483648
        %v250 = vsel %vm205, %v249, 2147483648
        %v251 = vand.u32 %v250, 65535
        %v252 = vshra.s32 %v250, 16
        %v253 = vcvt.s32.f32 %v251
        %v254 = vcvt.s32.f32 %v252
        %255 = vmax.xlane.f32.xlu0 %v254
        %v256 = vpop.xlane.xlu0 %255
        %vm257 = vcmp.eq.f32.partialorder %v254, %v256
        %v258 = vsel %vm257, %v253, -inf
        %259 = vmax.xlane.f32.xlu0 %v258
        %v260 = vpop.xlane.xlu0 %259
        %v261 = vcvt.f32.s32 %v260
        %v262 = vcvt.f32.s32 %v256
        %v263 = vshll.u32 %v262, 16
        %v264 = vadd.s32 %v263, %v261
        %v265 = vrot.slane %v264, 4
        %vm266 = vcmp.gt.s32.totalorder %v264, %v265
        %v267 = vsel %vm266, %v264, %v265
        %v268 = vrot.slane %v267, 2
        %vm269 = vcmp.gt.s32.totalorder %v267, %v268
        %v270 = vsel %vm269, %v267, %v268
        %v271 = vrot.slane %v270, 1
        %vm272 = vcmp.gt.s32.totalorder %v270, %v271
        %v273 = vsel %vm272, %v270, %v271
        %s274 = vtos %v273
        %v275 = vsel %vm200, %v248, 2147483647
        %v276 = vsel %vm205, %v275, 2147483647
        %v277 = vand.u32 %v276, 65535
        %v278 = vshra.s32 %v276, 16
        %v279 = vcvt.s32.f32 %v277
        %v280 = vcvt.s32.f32 %v278
        %281 = vmin.xlane.f32.xlu0 %v280
        %v282 = vpop.xlane.xlu0 %281
        %vm283 = vcmp.eq.f32.partialorder %v280, %v282
        %v284 = vsel %vm283, %v279, inf
        %285 = vmin.xlane.f32.xlu0 %v284
        %v286 = vpop.xlane.xlu0 %285
        %v287 = vcvt.f32.s32 %v286
        %v288 = vcvt.f32.s32 %v282
        %v289 = vshll.u32 %v288, 16
        %v290 = vadd.s32 %v289, %v287
        %v291 = vrot.slane %v290, 4
        %vm292 = vcmp.lt.s32.totalorder %v290, %v291
        %v293 = vsel %vm292, %v290, %v291
        %v294 = vrot.slane %v293, 2
        %vm295 = vcmp.lt.s32.totalorder %v293, %v294
        %v296 = vsel %vm295, %v293, %v294
        %v297 = vrot.slane %v296, 1
        %vm298 = vcmp.lt.s32.totalorder %v296, %v297
        %v299 = vsel %vm298, %v296, %v297
        %s300 = vtos %v299
        %s301 = ssub.s32 %s300, 1
        %s302 = sshra.s32 %s301, 1
        %s303 = sshra.s32 %s274, 1
        %s304 = sadd.s32 %s302, %s303
        %s305 = sand.u32 %s301, %s274
        %s306 = sand.u32 %s305, 1
        %s307 = sadd.s32 %s304, %s306
        %v308 = vstv %s307
        %vm309 = vcmp.gt.s32.totalorder %v249, %v308
        %v310 = vsel %vm309, 1, 0
        %v311 = vcvt.s32.f32 %v310
        %v312 = vsel %vm205, %v311, 0.0
        %313 = vadd.xlane.f32.xlu0 %v312
        %v314 = vpop.xlane.xlu0 %313
        %v315 = vrot.slane %v314, 4
        %v316 = vadd.f32 %v314, %v315
        %v317 = vrot.slane %v316, 2
        %v318 = vadd.f32 %v316, %v317
        %v319 = vrot.slane %v318, 1
        %v320 = vadd.f32 %v318, %v319
        %s321 = vtos %v320
        %p322 = scmp.ge.f32.partialorder %s321, %s244
        %s323 = scalar_select %p322, %s307, %s301
        %s324 = scalar_select %p322, %s274, %s307
        %s325 = sshra.s32 %s323, 1
        %s326 = sshra.s32 %s324, 1
        %s327 = sadd.s32 %s325, %s326
        %s328 = sand.u32 %s323, %s324
        %s329 = sand.u32 %s328, 1
        %s330 = sadd.s32 %s327, %s329
        %v331 = vstv %s330
        %vm332 = vcmp.gt.s32.totalorder %v249, %v331
        %v333 = vsel %vm332, 1, 0
        %v334 = vcvt.s32.f32 %v333
        %v335 = vsel %vm205, %v334, 0.0
        %336 = vadd.xlane.f32.xlu0 %v335
        %v337 = vpop.xlane.xlu0 %336
        %v338 = vrot.slane %v337, 4
        %v339 = vadd.f32 %v337, %v338
        %v340 = vrot.slane %v339, 2
        %v341 = vadd.f32 %v339, %v340
        %v342 = vrot.slane %v341, 1
        %v343 = vadd.f32 %v341, %v342
        %s344 = vtos %v343
        %p345 = scmp.ge.f32.partialorder %s344, %s244
        %s346 = scalar_select %p345, %s330, %s323
        %s347 = scalar_select %p345, %s324, %s330
        %s348 = sshra.s32 %s346, 1
        %s349 = sshra.s32 %s347, 1
        %s350 = sadd.s32 %s348, %s349
        %s351 = sand.u32 %s346, %s347
        %s352 = sand.u32 %s351, 1
        %s353 = sadd.s32 %s350, %s352
        %v354 = vstv %s353
        %vm355 = vcmp.gt.s32.totalorder %v249, %v354
        %v356 = vsel %vm355, 1, 0
        %v357 = vcvt.s32.f32 %v356
        %v358 = vsel %vm205, %v357, 0.0
        %359 = vadd.xlane.f32.xlu0 %v358
        %v360 = vpop.xlane.xlu0 %359
        %v361 = vrot.slane %v360, 4
        %v362 = vadd.f32 %v360, %v361
        %v363 = vrot.slane %v362, 2
        %v364 = vadd.f32 %v362, %v363
        %v365 = vrot.slane %v364, 1
        %v366 = vadd.f32 %v364, %v365
        %s367 = vtos %v366
        %p368 = scmp.ge.f32.partialorder %s367, %s244
        %s369 = scalar_select %p368, %s353, %s346
        %s370 = scalar_select %p368, %s347, %s353
        %s371 = sshra.s32 %s369, 1
        %s372 = sshra.s32 %s370, 1
        %s373 = sadd.s32 %s371, %s372
        %s374 = sand.u32 %s369, %s370
        %s375 = sand.u32 %s374, 1
        %s376 = sadd.s32 %s373, %s375
        %v377 = vstv %s376
        %vm378 = vcmp.gt.s32.totalorder %v249, %v377
        %v379 = vsel %vm378, 1, 0
        %v380 = vcvt.s32.f32 %v379
        %v381 = vsel %vm205, %v380, 0.0
        %382 = vadd.xlane.f32.xlu0 %v381
        %v383 = vpop.xlane.xlu0 %382
        %v384 = vrot.slane %v383, 4
        %v385 = vadd.f32 %v383, %v384
        %v386 = vrot.slane %v385, 2
        %v387 = vadd.f32 %v385, %v386
        %v388 = vrot.slane %v387, 1
        %v389 = vadd.f32 %v387, %v388
        %s390 = vtos %v389
        %p391 = scmp.ge.f32.partialorder %s390, %s244
        %s392 = scalar_select %p391, %s376, %s369
        %s393 = scalar_select %p391, %s370, %s376
        %s394 = sshra.s32 %s392, 1
        %s395 = sshra.s32 %s393, 1
        %s396 = sadd.s32 %s394, %s395
        %s397 = sand.u32 %s392, %s393
        %s398 = sand.u32 %s397, 1
        %s399 = sadd.s32 %s396, %s398
        %v400 = vstv %s399
        %vm401 = vcmp.gt.s32.totalorder %v249, %v400
        %v402 = vsel %vm401, 1, 0
        %v403 = vcvt.s32.f32 %v402
        %v404 = vsel %vm205, %v403, 0.0
        %405 = vadd.xlane.f32.xlu0 %v404
        %v406 = vpop.xlane.xlu0 %405
        %v407 = vrot.slane %v406, 4
        %v408 = vadd.f32 %v406, %v407
        %v409 = vrot.slane %v408, 2
        %v410 = vadd.f32 %v408, %v409
        %v411 = vrot.slane %v410, 1
        %v412 = vadd.f32 %v410, %v411
        %s413 = vtos %v412
        %p414 = scmp.ge.f32.partialorder %s413, %s244
        %s415 = scalar_select %p414, %s399, %s392
        %s416 = scalar_select %p414, %s393, %s399
        %s417 = sshra.s32 %s415, 1
        %s418 = sshra.s32 %s416, 1
        %s419 = sadd.s32 %s417, %s418
        %s420 = sand.u32 %s415, %s416
        %s421 = sand.u32 %s420, 1
        %s422 = sadd.s32 %s419, %s421
        %v423 = vstv %s422
        %vm424 = vcmp.gt.s32.totalorder %v249, %v423
        %v425 = vsel %vm424, 1, 0
        %v426 = vcvt.s32.f32 %v425
        %v427 = vsel %vm205, %v426, 0.0
        %428 = vadd.xlane.f32.xlu0 %v427
        %v429 = vpop.xlane.xlu0 %428
        %v430 = vrot.slane %v429, 4
        %v431 = vadd.f32 %v429, %v430
        %v432 = vrot.slane %v431, 2
        %v433 = vadd.f32 %v431, %v432
        %v434 = vrot.slane %v433, 1
        %v435 = vadd.f32 %v433, %v434
        %s436 = vtos %v435
        %p437 = scmp.ge.f32.partialorder %s436, %s244
        %s438 = scalar_select %p437, %s422, %s415
        %s439 = scalar_select %p437, %s416, %s422
        %s440 = sshra.s32 %s438, 1
        %s441 = sshra.s32 %s439, 1
        %s442 = sadd.s32 %s440, %s441
        %s443 = sand.u32 %s438, %s439
        %s444 = sand.u32 %s443, 1
        %s445 = sadd.s32 %s442, %s444
        %v446 = vstv %s445
        %vm447 = vcmp.gt.s32.totalorder %v249, %v446
        %v448 = vsel %vm447, 1, 0
        %v449 = vcvt.s32.f32 %v448
        %v450 = vsel %vm205, %v449, 0.0
        %451 = vadd.xlane.f32.xlu0 %v450
        %v452 = vpop.xlane.xlu0 %451
        %v453 = vrot.slane %v452, 4
        %v454 = vadd.f32 %v452, %v453
        %v455 = vrot.slane %v454, 2
        %v456 = vadd.f32 %v454, %v455
        %v457 = vrot.slane %v456, 1
        %v458 = vadd.f32 %v456, %v457
        %s459 = vtos %v458
        %p460 = scmp.ge.f32.partialorder %s459, %s244
        %s461 = scalar_select %p460, %s445, %s438
        %s462 = scalar_select %p460, %s439, %s445
        %s463 = sshra.s32 %s461, 1
        %s464 = sshra.s32 %s462, 1
        %s465 = sadd.s32 %s463, %s464
        %s466 = sand.u32 %s461, %s462
        %s467 = sand.u32 %s466, 1
        %s468 = sadd.s32 %s465, %s467
        %v469 = vstv %s468
        %vm470 = vcmp.gt.s32.totalorder %v249, %v469
        %v471 = vsel %vm470, 1, 0
        %v472 = vcvt.s32.f32 %v471
        %v473 = vsel %vm205, %v472, 0.0
        %474 = vadd.xlane.f32.xlu0 %v473
        %v475 = vpop.xlane.xlu0 %474
        %v476 = vrot.slane %v475, 4
        %v477 = vadd.f32 %v475, %v476
        %v478 = vrot.slane %v477, 2
        %v479 = vadd.f32 %v477, %v478
        %v480 = vrot.slane %v479, 1
        %v481 = vadd.f32 %v479, %v480
        %s482 = vtos %v481
        %p483 = scmp.ge.f32.partialorder %s482, %s244
        %s484 = scalar_select %p483, %s468, %s461
        %s485 = scalar_select %p483, %s462, %s468
        %s486 = sshra.s32 %s484, 1
        %s487 = sshra.s32 %s485, 1
        %s488 = sadd.s32 %s486, %s487
        %s489 = sand.u32 %s484, %s485
        %s490 = sand.u32 %s489, 1
        %s491 = sadd.s32 %s488, %s490
        %v492 = vstv %s491
        %vm493 = vcmp.gt.s32.totalorder %v249, %v492
        %v494 = vsel %vm493, 1, 0
        %v495 = vcvt.s32.f32 %v494
        %v496 = vsel %vm205, %v495, 0.0
        %497 = vadd.xlane.f32.xlu0 %v496
        %v498 = vpop.xlane.xlu0 %497
        %v499 = vrot.slane %v498, 4
        %v500 = vadd.f32 %v498, %v499
        %v501 = vrot.slane %v500, 2
        %v502 = vadd.f32 %v500, %v501
        %v503 = vrot.slane %v502, 1
        %v504 = vadd.f32 %v502, %v503
        %s505 = vtos %v504
        %p506 = scmp.ge.f32.partialorder %s505, %s244
        %s507 = scalar_select %p506, %s491, %s484
        %s508 = scalar_select %p506, %s485, %s491
        %s509 = sshra.s32 %s507, 1
        %s510 = sshra.s32 %s508, 1
        %s511 = sadd.s32 %s509, %s510
        %s512 = sand.u32 %s507, %s508
        %s513 = sand.u32 %s512, 1
        %s514 = sadd.s32 %s511, %s513
        %v515 = vstv %s514
        %vm516 = vcmp.gt.s32.totalorder %v249, %v515
        %v517 = vsel %vm516, 1, 0
        %v518 = vcvt.s32.f32 %v517
        %v519 = vsel %vm205, %v518, 0.0
        %520 = vadd.xlane.f32.xlu0 %v519
        %v521 = vpop.xlane.xlu0 %520
        %v522 = vrot.slane %v521, 4
        %v523 = vadd.f32 %v521, %v522
        %v524 = vrot.slane %v523, 2
        %v525 = vadd.f32 %v523, %v524
        %v526 = vrot.slane %v525, 1
        %v527 = vadd.f32 %v525, %v526
        %s528 = vtos %v527
        %p529 = scmp.ge.f32.partialorder %s528, %s244
        %s530 = scalar_select %p529, %s514, %s507
        %s531 = scalar_select %p529, %s508, %s514
        %s532 = sshra.s32 %s530, 1
        %s533 = sshra.s32 %s531, 1
        %s534 = sadd.s32 %s532, %s533
        %s535 = sand.u32 %s530, %s531
        %s536 = sand.u32 %s535, 1
        %s537 = sadd.s32 %s534, %s536
        %v538 = vstv %s537
        %vm539 = vcmp.gt.s32.totalorder %v249, %v538
        %v540 = vsel %vm539, 1, 0
        %v541 = vcvt.s32.f32 %v540
        %v542 = vsel %vm205, %v541, 0.0
        %543 = vadd.xlane.f32.xlu0 %v542
        %v544 = vpop.xlane.xlu0 %543
        %v545 = vrot.slane %v544, 4
        %v546 = vadd.f32 %v544, %v545
        %v547 = vrot.slane %v546, 2
        %v548 = vadd.f32 %v546, %v547
        %v549 = vrot.slane %v548, 1
        %v550 = vadd.f32 %v548, %v549
        %s551 = vtos %v550
        %p552 = scmp.ge.f32.partialorder %s551, %s244
        %s553 = scalar_select %p552, %s537, %s530
        %s554 = scalar_select %p552, %s531, %s537
        %s555 = sshra.s32 %s553, 1
        %s556 = sshra.s32 %s554, 1
        %s557 = sadd.s32 %s555, %s556
        %s558 = sand.u32 %s553, %s554
        %s559 = sand.u32 %s558, 1
        %s560 = sadd.s32 %s557, %s559
        %v561 = vstv %s560
        %vm562 = vcmp.gt.s32.totalorder %v249, %v561
        %v563 = vsel %vm562, 1, 0
        %v564 = vcvt.s32.f32 %v563
        %v565 = vsel %vm205, %v564, 0.0
        %566 = vadd.xlane.f32.xlu0 %v565
        %v567 = vpop.xlane.xlu0 %566
        %v568 = vrot.slane %v567, 4
        %v569 = vadd.f32 %v567, %v568
        %v570 = vrot.slane %v569, 2
        %v571 = vadd.f32 %v569, %v570
        %v572 = vrot.slane %v571, 1
        %v573 = vadd.f32 %v571, %v572
        %s574 = vtos %v573
        %p575 = scmp.ge.f32.partialorder %s574, %s244
        %s576 = scalar_select %p575, %s560, %s553
        %s577 = scalar_select %p575, %s554, %s560
        %s578 = sshra.s32 %s576, 1
        %s579 = sshra.s32 %s577, 1
        %s580 = sadd.s32 %s578, %s579
        %s581 = sand.u32 %s576, %s577
        %s582 = sand.u32 %s581, 1
        %s583 = sadd.s32 %s580, %s582
        %v584 = vstv %s583
        %vm585 = vcmp.gt.s32.totalorder %v249, %v584
        %v586 = vsel %vm585, 1, 0
        %v587 = vcvt.s32.f32 %v586
        %v588 = vsel %vm205, %v587, 0.0
        %589 = vadd.xlane.f32.xlu0 %v588
        %v590 = vpop.xlane.xlu0 %589
        %v591 = vrot.slane %v590, 4
        %v592 = vadd.f32 %v590, %v591
        %v593 = vrot.slane %v592, 2
        %v594 = vadd.f32 %v592, %v593
        %v595 = vrot.slane %v594, 1
        %v596 = vadd.f32 %v594, %v595
        %s597 = vtos %v596
        %p598 = scmp.ge.f32.partialorder %s597, %s244
        %s599 = scalar_select %p598, %s583, %s576
        %s600 = scalar_select %p598, %s577, %s583
        %s601 = sshra.s32 %s599, 1
        %s602 = sshra.s32 %s600, 1
        %s603 = sadd.s32 %s601, %s602
        %s604 = sand.u32 %s599, %s600
        %s605 = sand.u32 %s604, 1
        %s606 = sadd.s32 %s603, %s605
        %v607 = vstv %s606
        %vm608 = vcmp.gt.s32.totalorder %v249, %v607
        %v609 = vsel %vm608, 1, 0
        %v610 = vcvt.s32.f32 %v609
        %v611 = vsel %vm205, %v610, 0.0
        %612 = vadd.xlane.f32.xlu0 %v611
        %v613 = vpop.xlane.xlu0 %612
        %v614 = vrot.slane %v613, 4
        %v615 = vadd.f32 %v613, %v614
        %v616 = vrot.slane %v615, 2
        %v617 = vadd.f32 %v615, %v616
        %v618 = vrot.slane %v617, 1
        %v619 = vadd.f32 %v617, %v618
        %s620 = vtos %v619
        %p621 = scmp.ge.f32.partialorder %s620, %s244
        %s622 = scalar_select %p621, %s606, %s599
        %s623 = scalar_select %p621, %s600, %s606
        %s624 = sshra.s32 %s622, 1
        %s625 = sshra.s32 %s623, 1
        %s626 = sadd.s32 %s624, %s625
        %s627 = sand.u32 %s622, %s623
        %s628 = sand.u32 %s627, 1
        %s629 = sadd.s32 %s626, %s628
        %v630 = vstv %s629
        %vm631 = vcmp.gt.s32.totalorder %v249, %v630
        %v632 = vsel %vm631, 1, 0
        %v633 = vcvt.s32.f32 %v632
        %v634 = vsel %vm205, %v633, 0.0
        %635 = vadd.xlane.f32.xlu0 %v634
        %v636 = vpop.xlane.xlu0 %635
        %v637 = vrot.slane %v636, 4
        %v638 = vadd.f32 %v636, %v637
        %v639 = vrot.slane %v638, 2
        %v640 = vadd.f32 %v638, %v639
        %v641 = vrot.slane %v640, 1
        %v642 = vadd.f32 %v640, %v641
        %s643 = vtos %v642
        %p644 = scmp.ge.f32.partialorder %s643, %s244
        %s645 = scalar_select %p644, %s629, %s622
        %s646 = scalar_select %p644, %s623, %s629
        %s647 = sshra.s32 %s645, 1
        %s648 = sshra.s32 %s646, 1
        %s649 = sadd.s32 %s647, %s648
        %s650 = sand.u32 %s645, %s646
        %s651 = sand.u32 %s650, 1
        %s652 = sadd.s32 %s649, %s651
        %v653 = vstv %s652
        %vm654 = vcmp.gt.s32.totalorder %v249, %v653
        %v655 = vsel %vm654, 1, 0
        %v656 = vcvt.s32.f32 %v655
        %v657 = vsel %vm205, %v656, 0.0
        %658 = vadd.xlane.f32.xlu0 %v657
        %v659 = vpop.xlane.xlu0 %658
        %v660 = vrot.slane %v659, 4
        %v661 = vadd.f32 %v659, %v660
        %v662 = vrot.slane %v661, 2
        %v663 = vadd.f32 %v661, %v662
        %v664 = vrot.slane %v663, 1
        %v665 = vadd.f32 %v663, %v664
        %s666 = vtos %v665
        %p667 = scmp.ge.f32.partialorder %s666, %s244
        %s668 = scalar_select %p667, %s652, %s645
        %s669 = scalar_select %p667, %s646, %s652
        %s670 = sshra.s32 %s668, 1
        %s671 = sshra.s32 %s669, 1
        %s672 = sadd.s32 %s670, %s671
        %s673 = sand.u32 %s668, %s669
        %s674 = sand.u32 %s673, 1
        %s675 = sadd.s32 %s672, %s674
        %v676 = vstv %s675
        %vm677 = vcmp.gt.s32.totalorder %v249, %v676
        %v678 = vsel %vm677, 1, 0
        %v679 = vcvt.s32.f32 %v678
        %v680 = vsel %vm205, %v679, 0.0
        %681 = vadd.xlane.f32.xlu0 %v680
        %v682 = vpop.xlane.xlu0 %681
        %v683 = vrot.slane %v682, 4
        %v684 = vadd.f32 %v682, %v683
        %v685 = vrot.slane %v684, 2
        %v686 = vadd.f32 %v684, %v685
        %v687 = vrot.slane %v686, 1
        %v688 = vadd.f32 %v686, %v687
        %s689 = vtos %v688
        %p690 = scmp.ge.f32.partialorder %s689, %s244
        %s691 = scalar_select %p690, %s675, %s668
        %s692 = scalar_select %p690, %s669, %s675
        %s693 = sshra.s32 %s691, 1
        %s694 = sshra.s32 %s692, 1
        %s695 = sadd.s32 %s693, %s694
        %s696 = sand.u32 %s691, %s692
        %s697 = sand.u32 %s696, 1
        %s698 = sadd.s32 %s695, %s697
        %v699 = vstv %s698
        %vm700 = vcmp.gt.s32.totalorder %v249, %v699
        %v701 = vsel %vm700, 1, 0
        %v702 = vcvt.s32.f32 %v701
        %v703 = vsel %vm205, %v702, 0.0
        %704 = vadd.xlane.f32.xlu0 %v703
        %v705 = vpop.xlane.xlu0 %704
        %v706 = vrot.slane %v705, 4
        %v707 = vadd.f32 %v705, %v706
        %v708 = vrot.slane %v707, 2
        %v709 = vadd.f32 %v707, %v708
        %v710 = vrot.slane %v709, 1
        %v711 = vadd.f32 %v709, %v710
        %s712 = vtos %v711
        %p713 = scmp.ge.f32.partialorder %s712, %s244
        %s714 = scalar_select %p713, %s698, %s691
        %s715 = scalar_select %p713, %s692, %s698
        %s716 = sshra.s32 %s714, 1
        %s717 = sshra.s32 %s715, 1
        %s718 = sadd.s32 %s716, %s717
        %s719 = sand.u32 %s714, %s715
        %s720 = sand.u32 %s719, 1
        %s721 = sadd.s32 %s718, %s720
        %v722 = vstv %s721
        %vm723 = vcmp.gt.s32.totalorder %v249, %v722
        %v724 = vsel %vm723, 1, 0
        %v725 = vcvt.s32.f32 %v724
        %v726 = vsel %vm205, %v725, 0.0
        %727 = vadd.xlane.f32.xlu0 %v726
        %v728 = vpop.xlane.xlu0 %727
        %v729 = vrot.slane %v728, 4
        %v730 = vadd.f32 %v728, %v729
        %v731 = vrot.slane %v730, 2
        %v732 = vadd.f32 %v730, %v731
        %v733 = vrot.slane %v732, 1
        %v734 = vadd.f32 %v732, %v733
        %s735 = vtos %v734
        %p736 = scmp.ge.f32.partialorder %s735, %s244
        %s737 = scalar_select %p736, %s721, %s714
        %s738 = scalar_select %p736, %s715, %s721
        %s739 = sshra.s32 %s737, 1
        %s740 = sshra.s32 %s738, 1
        %s741 = sadd.s32 %s739, %s740
        %s742 = sand.u32 %s737, %s738
        %s743 = sand.u32 %s742, 1
        %s744 = sadd.s32 %s741, %s743
        %v745 = vstv %s744
        %vm746 = vcmp.gt.s32.totalorder %v249, %v745
        %v747 = vsel %vm746, 1, 0
        %v748 = vcvt.s32.f32 %v747
        %v749 = vsel %vm205, %v748, 0.0
        %750 = vadd.xlane.f32.xlu0 %v749
        %v751 = vpop.xlane.xlu0 %750
        %v752 = vrot.slane %v751, 4
        %v753 = vadd.f32 %v751, %v752
        %v754 = vrot.slane %v753, 2
        %v755 = vadd.f32 %v753, %v754
        %v756 = vrot.slane %v755, 1
        %v757 = vadd.f32 %v755, %v756
        %s758 = vtos %v757
        %p759 = scmp.ge.f32.partialorder %s758, %s244
        %s760 = scalar_select %p759, %s744, %s737
        %s761 = scalar_select %p759, %s738, %s744
        %s762 = sshra.s32 %s760, 1
        %s763 = sshra.s32 %s761, 1
        %s764 = sadd.s32 %s762, %s763
        %s765 = sand.u32 %s760, %s761
        %s766 = sand.u32 %s765, 1
        %s767 = sadd.s32 %s764, %s766
        %v768 = vstv %s767
        %vm769 = vcmp.gt.s32.totalorder %v249, %v768
        %v770 = vsel %vm769, 1, 0
        %v771 = vcvt.s32.f32 %v770
        %v772 = vsel %vm205, %v771, 0.0
        %773 = vadd.xlane.f32.xlu0 %v772
        %v774 = vpop.xlane.xlu0 %773
        %v775 = vrot.slane %v774, 4
        %v776 = vadd.f32 %v774, %v775
        %v777 = vrot.slane %v776, 2
        %v778 = vadd.f32 %v776, %v777
        %v779 = vrot.slane %v778, 1
        %v780 = vadd.f32 %v778, %v779
        %s781 = vtos %v780
        %p782 = scmp.ge.f32.partialorder %s781, %s244
        %s783 = scalar_select %p782, %s767, %s760
        %s784 = scalar_select %p782, %s761, %s767
        %s785 = sshra.s32 %s783, 1
        %s786 = sshra.s32 %s784, 1
        %s787 = sadd.s32 %s785, %s786
        %s788 = sand.u32 %s783, %s784
        %s789 = sand.u32 %s788, 1
        %s790 = sadd.s32 %s787, %s789
        %v791 = vstv %s790
        %vm792 = vcmp.gt.s32.totalorder %v249, %v791
        %v793 = vsel %vm792, 1, 0
        %v794 = vcvt.s32.f32 %v793
        %v795 = vsel %vm205, %v794, 0.0
        %796 = vadd.xlane.f32.xlu0 %v795
        %v797 = vpop.xlane.xlu0 %796
        %v798 = vrot.slane %v797, 4
        %v799 = vadd.f32 %v797, %v798
        %v800 = vrot.slane %v799, 2
        %v801 = vadd.f32 %v799, %v800
        %v802 = vrot.slane %v801, 1
        %v803 = vadd.f32 %v801, %v802
        %s804 = vtos %v803
        %p805 = scmp.ge.f32.partialorder %s804, %s244
        %s806 = scalar_select %p805, %s790, %s783
        %s807 = scalar_select %p805, %s784, %s790
        %s808 = sshra.s32 %s806, 1
        %s809 = sshra.s32 %s807, 1
        %s810 = sadd.s32 %s808, %s809
        %s811 = sand.u32 %s806, %s807
        %s812 = sand.u32 %s811, 1
        %s813 = sadd.s32 %s810, %s812
        %v814 = vstv %s813
        %vm815 = vcmp.gt.s32.totalorder %v249, %v814
        %v816 = vsel %vm815, 1, 0
        %v817 = vcvt.s32.f32 %v816
        %v818 = vsel %vm205, %v817, 0.0
        %819 = vadd.xlane.f32.xlu0 %v818
        %v820 = vpop.xlane.xlu0 %819
        %v821 = vrot.slane %v820, 4
        %v822 = vadd.f32 %v820, %v821
        %v823 = vrot.slane %v822, 2
        %v824 = vadd.f32 %v822, %v823
        %v825 = vrot.slane %v824, 1
        %v826 = vadd.f32 %v824, %v825
        %s827 = vtos %v826
        %p828 = scmp.ge.f32.partialorder %s827, %s244
        %s829 = scalar_select %p828, %s813, %s806
        %s830 = scalar_select %p828, %s807, %s813
        %s831 = sshra.s32 %s829, 1
        %s832 = sshra.s32 %s830, 1
        %s833 = sadd.s32 %s831, %s832
        %s834 = sand.u32 %s829, %s830
        %s835 = sand.u32 %s834, 1
        %s836 = sadd.s32 %s833, %s835
        %v837 = vstv %s836
        %vm838 = vcmp.gt.s32.totalorder %v249, %v837
        %v839 = vsel %vm838, 1, 0
        %v840 = vcvt.s32.f32 %v839
        %v841 = vsel %vm205, %v840, 0.0
        %842 = vadd.xlane.f32.xlu0 %v841
        %v843 = vpop.xlane.xlu0 %842
        %v844 = vrot.slane %v843, 4
        %v845 = vadd.f32 %v843, %v844
        %v846 = vrot.slane %v845, 2
        %v847 = vadd.f32 %v845, %v846
        %v848 = vrot.slane %v847, 1
        %v849 = vadd.f32 %v847, %v848
        %s850 = vtos %v849
        %p851 = scmp.ge.f32.partialorder %s850, %s244
        %s852 = scalar_select %p851, %s836, %s829
        %s853 = scalar_select %p851, %s830, %s836
        %s854 = sshra.s32 %s852, 1
        %s855 = sshra.s32 %s853, 1
        %s856 = sadd.s32 %s854, %s855
        %s857 = sand.u32 %s852, %s853
        %s858 = sand.u32 %s857, 1
        %s859 = sadd.s32 %s856, %s858
        %v860 = vstv %s859
        %vm861 = vcmp.gt.s32.totalorder %v249, %v860
        %v862 = vsel %vm861, 1, 0
        %v863 = vcvt.s32.f32 %v862
        %v864 = vsel %vm205, %v863, 0.0
        %865 = vadd.xlane.f32.xlu0 %v864
        %v866 = vpop.xlane.xlu0 %865
        %v867 = vrot.slane %v866, 4
        %v868 = vadd.f32 %v866, %v867
        %v869 = vrot.slane %v868, 2
        %v870 = vadd.f32 %v868, %v869
        %v871 = vrot.slane %v870, 1
        %v872 = vadd.f32 %v870, %v871
        %s873 = vtos %v872
        %p874 = scmp.ge.f32.partialorder %s873, %s244
        %s875 = scalar_select %p874, %s859, %s852
        %s876 = scalar_select %p874, %s853, %s859
        %s877 = sshra.s32 %s875, 1
        %s878 = sshra.s32 %s876, 1
        %s879 = sadd.s32 %s877, %s878
        %s880 = sand.u32 %s875, %s876
        %s881 = sand.u32 %s880, 1
        %s882 = sadd.s32 %s879, %s881
        %v883 = vstv %s882
        %vm884 = vcmp.gt.s32.totalorder %v249, %v883
        %v885 = vsel %vm884, 1, 0
        %v886 = vcvt.s32.f32 %v885
        %v887 = vsel %vm205, %v886, 0.0
        %888 = vadd.xlane.f32.xlu0 %v887
        %v889 = vpop.xlane.xlu0 %888
        %v890 = vrot.slane %v889, 4
        %v891 = vadd.f32 %v889, %v890
        %v892 = vrot.slane %v891, 2
        %v893 = vadd.f32 %v891, %v892
        %v894 = vrot.slane %v893, 1
        %v895 = vadd.f32 %v893, %v894
        %s896 = vtos %v895
        %p897 = scmp.ge.f32.partialorder %s896, %s244
        %s898 = scalar_select %p897, %s882, %s875
        %s899 = scalar_select %p897, %s876, %s882
        %s900 = sshra.s32 %s898, 1
        %s901 = sshra.s32 %s899, 1
        %s902 = sadd.s32 %s900, %s901
        %s903 = sand.u32 %s898, %s899
        %s904 = sand.u32 %s903, 1
        %s905 = sadd.s32 %s902, %s904
        %v906 = vstv %s905
        %vm907 = vcmp.gt.s32.totalorder %v249, %v906
        %v908 = vsel %vm907, 1, 0
        %v909 = vcvt.s32.f32 %v908
        %v910 = vsel %vm205, %v909, 0.0
        %911 = vadd.xlane.f32.xlu0 %v910
        %v912 = vpop.xlane.xlu0 %911
        %v913 = vrot.slane %v912, 4
        %v914 = vadd.f32 %v912, %v913
        %v915 = vrot.slane %v914, 2
        %v916 = vadd.f32 %v914, %v915
        %v917 = vrot.slane %v916, 1
        %v918 = vadd.f32 %v916, %v917
        %s919 = vtos %v918
        %p920 = scmp.ge.f32.partialorder %s919, %s244
        %s921 = scalar_select %p920, %s905, %s898
        %s922 = scalar_select %p920, %s899, %s905
        %s923 = sshra.s32 %s921, 1
        %s924 = sshra.s32 %s922, 1
        %s925 = sadd.s32 %s923, %s924
        %s926 = sand.u32 %s921, %s922
        %s927 = sand.u32 %s926, 1
        %s928 = sadd.s32 %s925, %s927
        %v929 = vstv %s928
        %vm930 = vcmp.gt.s32.totalorder %v249, %v929
        %v931 = vsel %vm930, 1, 0
        %v932 = vcvt.s32.f32 %v931
        %v933 = vsel %vm205, %v932, 0.0
        %934 = vadd.xlane.f32.xlu0 %v933
        %v935 = vpop.xlane.xlu0 %934
        %v936 = vrot.slane %v935, 4
        %v937 = vadd.f32 %v935, %v936
        %v938 = vrot.slane %v937, 2
        %v939 = vadd.f32 %v937, %v938
        %v940 = vrot.slane %v939, 1
        %v941 = vadd.f32 %v939, %v940
        %s942 = vtos %v941
        %p943 = scmp.ge.f32.partialorder %s942, %s244
        %s944 = scalar_select %p943, %s928, %s921
        %s945 = scalar_select %p943, %s922, %s928
        %s946 = sshra.s32 %s944, 1
        %s947 = sshra.s32 %s945, 1
        %s948 = sadd.s32 %s946, %s947
        %s949 = sand.u32 %s944, %s945
        %s950 = sand.u32 %s949, 1
        %s951 = sadd.s32 %s948, %s950
        %v952 = vstv %s951
        %vm953 = vcmp.gt.s32.totalorder %v249, %v952
        %v954 = vsel %vm953, 1, 0
        %v955 = vcvt.s32.f32 %v954
        %v956 = vsel %vm205, %v955, 0.0
        %957 = vadd.xlane.f32.xlu0 %v956
        %v958 = vpop.xlane.xlu0 %957
        %v959 = vrot.slane %v958, 4
        %v960 = vadd.f32 %v958, %v959
        %v961 = vrot.slane %v960, 2
        %v962 = vadd.f32 %v960, %v961
        %v963 = vrot.slane %v962, 1
        %v964 = vadd.f32 %v962, %v963
        %s965 = vtos %v964
        %p966 = scmp.ge.f32.partialorder %s965, %s244
        %s967 = scalar_select %p966, %s951, %s944
        %s968 = scalar_select %p966, %s945, %s951
        %s969 = sshra.s32 %s967, 1
        %s970 = sshra.s32 %s968, 1
        %s971 = sadd.s32 %s969, %s970
        %s972 = sand.u32 %s967, %s968
        %s973 = sand.u32 %s972, 1
        %s974 = sadd.s32 %s971, %s973
        %v975 = vstv %s974
        %vm976 = vcmp.gt.s32.totalorder %v249, %v975
        %v977 = vsel %vm976, 1, 0
        %v978 = vcvt.s32.f32 %v977
        %v979 = vsel %vm205, %v978, 0.0
        %980 = vadd.xlane.f32.xlu0 %v979
        %v981 = vpop.xlane.xlu0 %980
        %v982 = vrot.slane %v981, 4
        %v983 = vadd.f32 %v981, %v982
        %v984 = vrot.slane %v983, 2
        %v985 = vadd.f32 %v983, %v984
        %v986 = vrot.slane %v985, 1
        %v987 = vadd.f32 %v985, %v986
        %s988 = vtos %v987
        %p989 = scmp.ge.f32.partialorder %s988, %s244
        %s990 = scalar_select %p989, %s974, %s967
        %s991 = scalar_select %p989, %s968, %s974
        %s992 = sshra.s32 %s990, 1
        %s993 = sshra.s32 %s991, 1
        %s994 = sadd.s32 %s992, %s993
        %s995 = sand.u32 %s990, %s991
        %s996 = sand.u32 %s995, 1
        %s997 = sadd.s32 %s994, %s996
        %v998 = vstv %s997
        %vm999 = vcmp.gt.s32.totalorder %v249, %v998
        %v1000 = vsel %vm999, 1, 0
        %v1001 = vcvt.s32.f32 %v1000
        %v1002 = vsel %vm205, %v1001, 0.0
        %1003 = vadd.xlane.f32.xlu0 %v1002
        %v1004 = vpop.xlane.xlu0 %1003
        %v1005 = vrot.slane %v1004, 4
        %v1006 = vadd.f32 %v1004, %v1005
        %v1007 = vrot.slane %v1006, 2
        %v1008 = vadd.f32 %v1006, %v1007
        %v1009 = vrot.slane %v1008, 1
        %v1010 = vadd.f32 %v1008, %v1009
        %s1011 = vtos %v1010
        %p1012 = scmp.ge.f32.partialorder %s1011, %s244
        %s1013 = scalar_select %p1012, %s997, %s990
        %s1014 = scalar_select %p1012, %s991, %s997
        %s1015 = sshra.s32 %s1013, 1
        %s1016 = sshra.s32 %s1014, 1
        %s1017 = sadd.s32 %s1015, %s1016
        %s1018 = sand.u32 %s1013, %s1014
        %s1019 = sand.u32 %s1018, 1
        %s1020 = sadd.s32 %s1017, %s1019
        %v1021 = vstv %s1020
        %vm1022 = vcmp.gt.s32.totalorder %v249, %v1021
        %v1023 = vsel %vm1022, 1, 0
        %v1024 = vcvt.s32.f32 %v1023
        %v1025 = vsel %vm205, %v1024, 0.0
        %1026 = vadd.xlane.f32.xlu0 %v1025
        %v1027 = vpop.xlane.xlu0 %1026
        %v1028 = vrot.slane %v1027, 4
        %v1029 = vadd.f32 %v1027, %v1028
        %v1030 = vrot.slane %v1029, 2
        %v1031 = vadd.f32 %v1029, %v1030
        %v1032 = vrot.slane %v1031, 1
        %v1033 = vadd.f32 %v1031, %v1032
        %s1034 = vtos %v1033
        %p1035 = scmp.ge.f32.partialorder %s1034, %s244
        %s1036 = scalar_select %p1035, %s1014, %s1020
        %p1037 = scmp.gt.f32.partialorder %s225, 0.0
        %v1038 = vstv %s1036
        %vm1039 = vcmp.le.s32.totalorder %v248, %v1038
        %vm1040 = vmand %vm200, %vm1039
        %v1041 = vsel %vm1040, %v198, -3e+38
        %v1042 = vsel %vm205, %v1041, -inf
        %1043 = vmax.xlane.f32.xlu0 %v1042
        %v1044 = vpop.xlane.xlu0 %1043
        %v1045 = vrot.slane %v1044, 4
        %v1046 = vmax.f32 %v1044, %v1045
        %v1047 = vrot.slane %v1046, 2
        %v1048 = vmax.f32 %v1046, %v1047
        %v1049 = vrot.slane %v1048, 1
        %v1050 = vmax.f32 %v1048, %v1049
        %s1051 = vtos %v1050
        %s1052 = scalar_select %p1037, %s1051, 0.0
        %v1053 = vsel %vm200, %v198, -3e+38
        %v1054 = vsel %vm205, %v1053, -inf
        %1055 = vmax.xlane.f32.xlu0 %v1054
        %v1056 = vpop.xlane.xlu0 %1055
        %v1057 = vrot.slane %v1056, 4
        %v1058 = vmax.f32 %v1056, %v1057
        %v1059 = vrot.slane %v1058, 2
        %v1060 = vmax.f32 %v1058, %v1059
        %v1061 = vrot.slane %v1060, 1
        %v1062 = vmax.f32 %v1060, %v1061
        %s1063 = vtos %v1062
        %s1064 = scalar_select %p1037, %s1063, 0.0
        %v1065 = vstv %s1052
        %vm1066 = vcmp.gt.f32.partialorder %v198, %v1065
        %vm1067 = vmand %vm200, %vm1066
        %v1068 = vsel %vm1067, 1, 0
        %v1069 = vcvt.s32.f32 %v1068
        %v1070 = vstv %s1064
        %v1071 = vsel %vm1067, %v198, %v1070
        %v1072 = vsub.f32 %v1071, %v1070
        %v1073 = vmul.f32 %v1072, 1.442695
        %v1074 = vpow.pop %v1073
        %v1075 = vsel %vm205, %v1069, 0.0
        %1076 = vadd.xlane.f32.xlu0 %v1075
        %v1077 = vpop.xlane.xlu0 %1076
        %v1078 = vrot.slane %v1077, 4
        %v1079 = vadd.f32 %v1077, %v1078
        %v1080 = vrot.slane %v1079, 2
        %v1081 = vadd.f32 %v1079, %v1080
        %v1082 = vrot.slane %v1081, 1
        %v1083 = vadd.f32 %v1081, %v1082
        %s1084 = vtos %v1083
        %v1085 = vmul.f32 %v1069, %v1074
        %v1086 = vsel %vm205, %v1085, 0.0
        %1087 = vadd.xlane.f32.xlu0 %v1086
        %v1088 = vpop.xlane.xlu0 %1087
        %v1089 = vrot.slane %v1088, 4
        %v1090 = vadd.f32 %v1088, %v1089
        %v1091 = vrot.slane %v1090, 2
        %v1092 = vadd.f32 %v1090, %v1091
        %v1093 = vrot.slane %v1092, 1
        %v1094 = vadd.f32 %v1092, %v1093
        %s1095 = vtos %v1094
        %v1096 = vmul.f32 %v1069, %v198
        %v1097 = vmul.f32 %v1096, %v1074
        %v1098 = vsel %vm205, %v1097, 0.0
        %1099 = vadd.xlane.f32.xlu0 %v1098
        %v1100 = vpop.xlane.xlu0 %1099
        %v1101 = vrot.slane %v1100, 4
        %v1102 = vadd.f32 %v1100, %v1101
        %v1103 = vrot.slane %v1102, 2
        %v1104 = vadd.f32 %v1102, %v1103
        %v1105 = vrot.slane %v1104, 1
        %v1106 = vadd.f32 %v1104, %v1105
        %s1107 = vtos %v1106
        %s1108 = ssub.f32 %s244, %s1084
        %s1109 = smax.f32 %s1108, 0.0
        %s1110 = ssub.f32 %s1052, %s1064
        %v1111 = vstv %s1110
        %v1112 = vmul.f32 %v1111, 1.442695
        %v1113 = vpow.pop %v1112
        %s1114 = vtos %v1113
        %s1115 = smul.f32 %s1109, %s1114
        %s1116 = sadd.f32 %s1095, %s1115
        %s1117 = smul.f32 %s1109, %s1052
        %s1118 = smul.f32 %s1117, %s1114
        %s1119 = sadd.f32 %s1107, %s1118
        %s1120 = smax.f32 %s1116, 1e-30
        %v1121 = vstv %s1120
        %v1122 = vrcp.pop %v1121
        %s1123 = vtos %v1122
        %s1124 = smul.f32 %s1119, %s1123
        %v1125 = vmul.f32 %v198, %v202
        %v1126 = vsel %vm205, %v1125, 0.0
        %1127 = vadd.xlane.f32.xlu0 %v1126
        %v1128 = vpop.xlane.xlu0 %1127
        %v1129 = vrot.slane %v1128, 4
        %v1130 = vadd.f32 %v1128, %v1129
        %v1131 = vrot.slane %v1130, 2
        %v1132 = vadd.f32 %v1130, %v1131
        %v1133 = vrot.slane %v1132, 1
        %v1134 = vadd.f32 %v1132, %v1133
        %s1135 = vtos %v1134
        %s1136 = smax.f32 %s215, 1.0
        %v1137 = vstv %s1136
        %v1138 = vrcp.pop %v1137
        %s1139 = vtos %v1138
        %s1140 = smul.f32 %s1135, %s1139
        %s1141 = scalar_select %p240, %s1140, 1.0
        %s1142 = ssub.f32 %s1124, %s1141
        %s1143 = sadd.f32 %s1142, 0.5
        %s1144 = smul.f32 %s1143, 4.0
        %v1145 = vstv %s1144
        %v1146 = vmul.f32 %v1145, 1.442695
        %v1147 = vpow.pop %v1146
        %s1148 = vtos %v1147
        %s1149 = sadd.f32 %s1148, 1.0
        %v1150 = vstv %s1149
        %v1151 = vlog2.pop %v1150
        %v1152 = vmul.f32 %v1151, 0.6931472
        %s1153 = vtos %v1152
        %v1154 = vrcp.pop 4.0
        %s1155 = vtos %v1154
        %s1156 = smul.f32 %s1153, %s1155
        %p1157 = scmp.gt.f32.partialorder %s239, 0.0
        %s1158 = scalar_select %p1157, %s1156, 0.0
        %v1159 = vlaneseq
        %v1160 = vand.u32 %v1159, 127
        %vm1161 = vcmp.eq.s32.totalorder %v1160, 0
        %vm1162 = vcmp.eq.s32.totalorder %v1160, 1
        %s1163 = scalar_select %p1157, 1, 0
        %s1164 = scvt.s32.f32 %s1163
        %v1165 = vstv %s1164
        %v1166 = vsel %vm1162, %v1165, 0.0
        %v1167 = vstv %s1158
        %v1168 = vsel %vm1161, %v1167, %v1166
        %1169 = vst [vmem:[%s194] sm:$0x1] %v1168
        %s1170 = sand.u32 %s82, 1
        %s1171 = scalar_lea.sflag [#allocation4], %s1170
        %s1172 = sand.u32 %s82, 1
        %s1173 = scalar_lea.vmem [#allocation7], %s1172
        // Predicated region
        $region37: #{tpu_custom_call.1} parent=27 // pred_check
          %p1174 = pneg %p92
        $region38: #{tpu_custom_call.1} parent=27 // pred_check_branch
          %1176 = sbr.rel (%p1174) target = $region40
        $region39: #{tpu_custom_call.1} parent=27 // pred_region
          %s1178 = ssub.s32 16, 16
          %1179 = vsyncadd %s1171, %s1178
          %s1180 = smul.addr %s22, 16
          %s1181 = scalar_lea.hbm %s2, %s1180
          %s1183 = sshll.u32 %s1173, 4
          %s1184 = int_to_ptr.vmem [resolvable:$true] %s1183
          %1186 = dma.vmem_to_hbm [thread:$0]  %s1184, 16, %s1181, %s1171
        $region40: #{tpu_custom_call.1} parent=27 // pred_fallthru
          _
      $region28: #{tpu_custom_call.1} parent=5 // pred_fallthru
        _
      %p1187 = scmp.le.s32.totalorder 2, %s17
      // Predicated region
      $region41: #{tpu_custom_call.1} parent=5 // pred_check
        %p1188 = pneg %p1187
      $region42: #{tpu_custom_call.1} parent=5 // pred_check_branch
        %1190 = sbr.rel (%p1188) target = $region44
      $region43: #{tpu_custom_call.1} parent=5 // pred_region
        %s1191 = ssub.s32 %s17, 2
        // Predicated region
        $region45: #{tpu_custom_call.1} parent=43 // pred_check
          %p1192 = pneg %p98
        $region46: #{tpu_custom_call.1} parent=43 // pred_check_branch
          %1194 = sbr.rel (%p1192) target = $region48
        $region47: #{tpu_custom_call.1} parent=43 // pred_region
          %s1195 = sand.u32 %s83, 1
          %s1196 = scalar_lea.sflag [#allocation4], %s1195
          %s1197 = sand.u32 %s83, 1
          %s1198 = scalar_lea.vmem [#allocation7], %s1197
          %1199 = dma.done %s1196, 16
        $region48: #{tpu_custom_call.1} parent=43 // pred_fallthru
          _
      $region44: #{tpu_custom_call.1} parent=5 // pred_fallthru
        _
    $region6: #{tpu_custom_call.1} parent=1 // loop_footer
      %s21 = sadd.s32 1, %s17
    $region7: #{tpu_custom_call.1} parent=1 // loop_footer_branch
      %16 = sbr.rel target = $region3
    $region8: #{tpu_custom_call.1} parent=1 // loop_exit
      _
    %1200 = vsyncpa [#allocation3], 1
    %s1201 = scalar_lea.sflag [#allocation3], 1
    %1202 = vsyncpa %s1201, 1
    %1203 = vsyncpa [#allocation6], 1
    %s1204 = scalar_lea.sflag [#allocation6], 1
    %1205 = vsyncpa %s1204, 1
    %1206 = vsyncpa [#allocation4], 1
    %s1207 = scalar_lea.sflag [#allocation4], 1
    %1208 = vsyncpa %s1207, 1

</llo_original>
